<compile_context>
chip_gen: v6e
topology: v6e:2x2x1
jax: 0.10.0
libtpu: 0.0.40
codegen_flags: <defaults>
</compile_context>

<pallas_src>
import jax
import jax.numpy as jnp
from jax.experimental import pallas as pl
from jax.experimental.pallas import tpu as pltpu

# ----------------- small, forward-consistent config -----------------
D_MODEL = 32      # stands in for 768 ('base') hidden size
N_HEADS = 4
D_KV = 8
D_FF = 64
N_LAYERS = 2
VOCAB = 64
NUM_BUCKETS = 8
MAX_DISTANCE = 16
NUM_LABELS = 2
EPS = 1e-6
BATCH = 2
SEQ = 8


# ============================ Pallas kernel ============================

def _encoder_kernel(x_ref, bias_ref, mask_ref, ln1_ref, wqkv_ref, wo_ref,
                    ln2_ref, wi_ref, woff_ref, lnf_ref, clsw_ref, clsb_ref,
                    o_ref, h_ref):
    """One (batch element, layer) grid step of the fused T5 encoder.

    grid = (B, L).  The residual stream for the current batch element lives in
    the VMEM scratch `h_ref` across the layer axis; per-layer weights are
    streamed in by BlockSpec (double-buffered behind the previous layer's
    compute).  At the last layer the final RMSNorm + classifier head run on
    token 0 only and a [1, num_labels] logits row is written.
    """
    layer = pl.program_id(1)
    hd = N_HEADS * D_KV

    @pl.when(layer == 0)
    def _():
        h_ref[...] = x_ref[...].astype(jnp.float32)

    h = h_ref[...]                                        # [S, D] residual (f32)
    bias = bias_ref[...].astype(jnp.float32)              # [H, S, S] rel-pos bias
    mask = mask_ref[...].astype(jnp.float32)[None]        # [1, 1, S] additive pad mask

    # ---- self-attention sublayer (pre-norm, residual) ----
    var = jnp.mean(h * h, axis=-1, keepdims=True)
    normed = h * jax.lax.rsqrt(var + EPS) * ln1_ref[...]                  # [S, D]
    # fused QKV projection: one MXU pass -> [S, 3*H*Dh]
    qkv = jnp.dot(normed, wqkv_ref[...], preferred_element_type=jnp.float32)

    # head-major views [H, S, Dh] (major-dim stack of static lane slices)
    q = jnp.stack([qkv[:, i * D_KV:(i + 1) * D_KV]
                   for i in range(N_HEADS)], axis=0)
    k = jnp.stack([qkv[:, hd + i * D_KV:hd + (i + 1) * D_KV]
                   for i in range(N_HEADS)], axis=0)
    v = jnp.stack([qkv[:, 2 * hd + i * D_KV:2 * hd + (i + 1) * D_KV]
                   for i in range(N_HEADS)], axis=0)

    # T5 attention has NO 1/sqrt(d) scaling.  All heads in one batched einsum.
    s = jnp.einsum('hqd,hkd->hqk', q, k,
                   preferred_element_type=jnp.float32)                    # [H, S, S]
    s = s + bias + mask
    s = s - jnp.max(s, axis=-1, keepdims=True)
    p = jnp.exp(s)
    p = p * pl.reciprocal(jnp.sum(p, axis=-1, keepdims=True), approx=True)
    ctx = jnp.einsum('hqk,hkd->hqd', p, v,
                     preferred_element_type=jnp.float32)                  # [H, S, Dh]

    # merge heads once; ONE output projection with K = H*Dh (not H small K=Dh).
    merged = jnp.concatenate([ctx[i] for i in range(N_HEADS)], axis=-1)   # [S, H*Dh]
    h = h + jnp.dot(merged, wo_ref[...], preferred_element_type=jnp.float32)

    # ---- feed-forward sublayer (pre-norm, residual) ----
    var = jnp.mean(h * h, axis=-1, keepdims=True)
    normed = h * jax.lax.rsqrt(var + EPS) * ln2_ref[...]
    ff = jnp.dot(normed, wi_ref[...], preferred_element_type=jnp.float32)  # [S, F]
    ff = jnp.maximum(ff, 0.0)                                              # ReLU, f32
    h = h + jnp.dot(ff, woff_ref[...], preferred_element_type=jnp.float32)

    h_ref[...] = h

    # ---- epilogue: final RMSNorm on token 0 + fused classifier head ----
    @pl.when(layer == pl.num_programs(1) - 1)
    def _():
        h0 = h[0:1, :]                                                     # [1, D]
        v0 = jnp.mean(h0 * h0, axis=-1, keepdims=True)
        h0 = h0 * jax.lax.rsqrt(v0 + EPS) * lnf_ref[...]
        logits = jnp.dot(h0, clsw_ref[...],
                         preferred_element_type=jnp.float32) + clsb_ref[...]
        o_ref[...] = logits.astype(o_ref.dtype)                            # [1, labels]


def t5_encode_classify(hidden, pos_bias, pad_mask, layers, final_ln, cls_w, cls_b):
    """hidden [B,S,D]; pos_bias [1,H,S,S] (batch/layer invariant);
    pad_mask [B,1,S] additive (-1e9 on padding).  Returns [B, 1, NUM_LABELS]."""
    B, S, D = hidden.shape
    hd = N_HEADS * D_KV
    return pl.pallas_call(
        _encoder_kernel,
        out_shape=jax.ShapeDtypeStruct((B, 1, NUM_LABELS), jnp.float32),
        grid=(B, N_LAYERS),
        in_specs=[
            pl.BlockSpec((None, S, D), lambda b, l: (b, 0, 0)),               # hidden
            pl.BlockSpec((None, N_HEADS, S, S), lambda b, l: (0, 0, 0, 0)),   # pos bias (invariant)
            pl.BlockSpec((None, 1, S), lambda b, l: (b, 0, 0)),               # pad mask
            pl.BlockSpec((None, 1, D), lambda b, l: (l, 0, 0)),               # ln1   (per-layer)
            pl.BlockSpec((None, D, 3 * hd), lambda b, l: (l, 0, 0)),          # wqkv  (per-layer)
            pl.BlockSpec((None, hd, D), lambda b, l: (l, 0, 0)),              # wo    (per-layer)
            pl.BlockSpec((None, 1, D), lambda b, l: (l, 0, 0)),               # ln2   (per-layer)
            pl.BlockSpec((None, D, D_FF), lambda b, l: (l, 0, 0)),            # wi    (per-layer)
            pl.BlockSpec((None, D_FF, D), lambda b, l: (l, 0, 0)),            # wo_ff (per-layer)
            pl.BlockSpec((1, D), lambda b, l: (0, 0)),                        # final LN (invariant)
            pl.BlockSpec((D, NUM_LABELS), lambda b, l: (0, 0)),               # cls_w (invariant)
            pl.BlockSpec((1, NUM_LABELS), lambda b, l: (0, 0)),               # cls_b (invariant)
        ],
        out_specs=pl.BlockSpec((None, 1, NUM_LABELS), lambda b, l: (b, 0, 0)),
        scratch_shapes=[pltpu.VMEM((S, D), jnp.float32)],                     # residual stream
        compiler_params=pltpu.CompilerParams(
            dimension_semantics=("parallel", "arbitrary")),
    )(hidden, pos_bias, pad_mask, layers['ln1'], layers['wqkv'], layers['wo'],
      layers['ln2'], layers['wi'], layers['wo_ff'], final_ln, cls_w, cls_b)


# ============================ plain-JAX glue ============================

def _rel_pos_bucket(rel_pos, num_buckets, max_distance):
    # bidirectional bucketing (T5 encoder).
    num_buckets = num_buckets // 2
    ret = (rel_pos > 0).astype(jnp.int32) * num_buckets
    n = jnp.abs(rel_pos)
    max_exact = num_buckets // 2
    is_small = n < max_exact
    n_f = jnp.maximum(n, 1).astype(jnp.float32)
    val_if_large = max_exact + (
        jnp.log(n_f / max_exact) / jnp.log(max_distance / max_exact)
        * (num_buckets - max_exact)).astype(jnp.int32)
    val_if_large = jnp.minimum(val_if_large, num_buckets - 1)
    return ret + jnp.where(is_small, n, val_if_large)


def t5_position_bias(rel_bias_emb, seq_len):
    ctx = jnp.arange(seq_len)[:, None]
    mem = jnp.arange(seq_len)[None, :]
    buckets = _rel_pos_bucket(mem - ctx, NUM_BUCKETS, MAX_DISTANCE)   # [S, S]
    bias = rel_bias_emb[buckets]                                      # [S, S, H]
    return jnp.transpose(bias, (2, 0, 1))[None]                       # [1, H, S, S]


def init_params(key):
    ks = iter(jax.random.split(key, 16))

    def nrm(shape, std=0.05):
        return jax.random.normal(next(ks), shape, jnp.float32) * std

    # Per-layer weights are stacked along a leading layer axis; the layer axis
    # is a grid dimension so only one layer's weights are VMEM-resident at a
    # time (double-buffered).
    layers = {
        'ln1': jnp.ones((N_LAYERS, 1, D_MODEL), jnp.float32),
        'wqkv': nrm((N_LAYERS, D_MODEL, 3 * N_HEADS * D_KV)),   # wq|wk|wv fused
        'wo': nrm((N_LAYERS, N_HEADS * D_KV, D_MODEL)),
        'ln2': jnp.ones((N_LAYERS, 1, D_MODEL), jnp.float32),
        'wi': nrm((N_LAYERS, D_MODEL, D_FF)),
        'wo_ff': nrm((N_LAYERS, D_FF, D_MODEL)),
    }
    params = {
        'embed': nrm((VOCAB, D_MODEL), 1.0),
        'rel_bias': nrm((NUM_BUCKETS, N_HEADS), 0.1),
        'final_ln': jnp.ones((1, D_MODEL), jnp.float32),
        'cls_w': nrm((D_MODEL, NUM_LABELS)),     # transpose of nn.Linear weight
        'cls_b': nrm((1, NUM_LABELS)),
        'layers': layers,
    }
    return params


def t5_encoder_classifier_forward(params, input_ids, attention_mask):
    """Mirrors T5EncoderClassifier.forward after tokenization:
       encoder(last_hidden_state)[:, 0, :] @ classifier (+ bias)."""
    B, S = input_ids.shape
    hidden = jnp.take(params['embed'], input_ids, axis=0)             # [B, S, D]

    # Batch-invariant relative-position bias; per-batch additive padding mask.
    # NOTE: token 0 must never be padding (it feeds the classifier head).
    pos_bias = t5_position_bias(params['rel_bias'], S)                # [1, H, S, S]
    pad_mask = ((1.0 - attention_mask.astype(jnp.float32)) * -1e9)[:, None, :]  # [B, 1, S]

    out = t5_encode_classify(hidden, pos_bias, pad_mask, params['layers'],
                             params['final_ln'], params['cls_w'], params['cls_b'])
    return out[:, 0, :]                                               # [B, NUM_LABELS]


if __name__ == "__main__":
    key = jax.random.PRNGKey(0)
    k_param, k_ids = jax.random.split(key)
    params = init_params(k_param)

    # What the tokenizer would have produced (ids + padding mask).
    input_ids = jax.random.randint(k_ids, (BATCH, SEQ), 0, VOCAB, dtype=jnp.int32)
    attention_mask = jnp.ones((BATCH, SEQ), dtype=jnp.int32)
    attention_mask = attention_mask.at[1, SEQ - 2:].set(0)            # pad tail of example 1

    fwd = jax.jit(t5_encoder_classifier_forward)
    logits = fwd(params, input_ids, attention_mask)
    jax.block_until_ready(logits)
    assert logits.shape == (BATCH, NUM_LABELS) and logits.dtype == jnp.float32
    assert bool(jnp.all(jnp.isfinite(logits)))
    print("KERNEL_OK")
</pallas_src>

<mosaic_0001>
module attributes {stable_mosaic.version = 11 : i64} {
  func.func @_encoder_kernel(%arg0: i32, %arg1: i32, %arg2: memref<1x8x32xf32, #tpu.memory_space<vmem>>, %arg3: memref<1x4x8x8xf32, #tpu.memory_space<vmem>>, %arg4: memref<1x1x8xf32, #tpu.memory_space<vmem>>, %arg5: memref<1x1x32xf32, #tpu.memory_space<vmem>>, %arg6: memref<1x32x96xf32, #tpu.memory_space<vmem>>, %arg7: memref<1x32x32xf32, #tpu.memory_space<vmem>>, %arg8: memref<1x1x32xf32, #tpu.memory_space<vmem>>, %arg9: memref<1x32x64xf32, #tpu.memory_space<vmem>>, %arg10: memref<1x64x32xf32, #tpu.memory_space<vmem>>, %arg11: memref<1x32xf32, #tpu.memory_space<vmem>>, %arg12: memref<32x2xf32, #tpu.memory_space<vmem>>, %arg13: memref<1x2xf32, #tpu.memory_space<vmem>>, %arg14: memref<1x1x2xf32, #tpu.memory_space<vmem>>, %arg15: memref<8x32xf32, #tpu.memory_space<vmem>>) attributes {dimension_semantics = [#tpu.dimension_semantics<parallel>, #tpu.dimension_semantics<arbitrary>], iteration_bounds = array<i64: 2, 2>, scalar_prefetch = 0 : i64, scratch_operands = 1 : i64, tpu.core_type = #tpu.core_type<tc>, window_params = [{transform_indices = @transform_0, window_bounds = array<i64: 1, 8, 32>}, {pipeline_mode = #tpu.pipeline_mode<synchronous>, transform_indices = @transform_1, window_bounds = array<i64: 1, 4, 8, 8>}, {transform_indices = @transform_2, window_bounds = array<i64: 1, 1, 8>}, {transform_indices = @transform_3, window_bounds = array<i64: 1, 1, 32>}, {transform_indices = @transform_4, window_bounds = array<i64: 1, 32, 96>}, {transform_indices = @transform_5, window_bounds = array<i64: 1, 32, 32>}, {transform_indices = @transform_6, window_bounds = array<i64: 1, 1, 32>}, {transform_indices = @transform_7, window_bounds = array<i64: 1, 32, 64>}, {transform_indices = @transform_8, window_bounds = array<i64: 1, 64, 32>}, {pipeline_mode = #tpu.pipeline_mode<synchronous>, transform_indices = @transform_9, window_bounds = array<i64: 1, 32>}, {pipeline_mode = #tpu.pipeline_mode<synchronous>, transform_indices = @transform_10, window_bounds = array<i64: 32, 2>}, {pipeline_mode = #tpu.pipeline_mode<synchronous>, transform_indices = @transform_11, window_bounds = array<i64: 1, 2>}, {transform_indices = @transform_12, window_bounds = array<i64: 1, 1, 2>}]} {
    %c0_i32 = arith.constant 0 : i32
    %0 = arith.cmpi eq, %arg1, %c0_i32 : i32
    %1 = arith.extui %0 : i1 to i32
    %c0_i32_0 = arith.constant 0 : i32
    %2 = arith.cmpi ne, %1, %c0_i32_0 : i32
    scf.if %2 {
      %c0_44 = arith.constant 0 : index
      %c0_45 = arith.constant 0 : index
      %c0_46 = arith.constant 0 : index
      %108 = vector.load %arg2[%c0_44, %c0_45, %c0_46] : memref<1x8x32xf32, #tpu.memory_space<vmem>>, vector<1x8x32xf32>
      %109 = vector.shape_cast %108 : vector<1x8x32xf32> to vector<8x32xf32>
      %c0_47 = arith.constant 0 : index
      %c0_48 = arith.constant 0 : index
      %110 = vector.load %arg15[%c0_47, %c0_48] : memref<8x32xf32, #tpu.memory_space<vmem>>, vector<8x32xf32>
      tpu.vector_store %arg15[%c0_47, %c0_48], %109 {strides = array<i32>} : memref<8x32xf32, #tpu.memory_space<vmem>>, vector<8x32xf32>,
    } else {
    }
    %c0 = arith.constant 0 : index
    %c0_1 = arith.constant 0 : index
    %3 = vector.load %arg15[%c0, %c0_1] : memref<8x32xf32, #tpu.memory_space<vmem>>, vector<8x32xf32>
    %c0_2 = arith.constant 0 : index
    %c0_3 = arith.constant 0 : index
    %c0_4 = arith.constant 0 : index
    %c0_5 = arith.constant 0 : index
    %4 = vector.load %arg3[%c0_2, %c0_3, %c0_4, %c0_5] : memref<1x4x8x8xf32, #tpu.memory_space<vmem>>, vector<1x4x8x8xf32>
    %5 = vector.shape_cast %4 : vector<1x4x8x8xf32> to vector<4x8x8xf32>
    %c0_6 = arith.constant 0 : index
    %c0_7 = arith.constant 0 : index
    %c0_8 = arith.constant 0 : index
    %6 = vector.load %arg4[%c0_6, %c0_7, %c0_8] : memref<1x1x8xf32, #tpu.memory_space<vmem>>, vector<1x1x8xf32>
    %7 = vector.shape_cast %6 : vector<1x1x8xf32> to vector<1x8xf32>
    %8 = vector.shape_cast %7 : vector<1x8xf32> to vector<1x1x8xf32>
    %9 = arith.mulf %3, %3 : vector<8x32xf32>
    %cst = arith.constant dense<0.000000e+00> : vector<8xf32>
    %10 = vector.multi_reduction <add>, %9, %cst [1] : vector<8x32xf32> to vector<8xf32>
    %11 = vector.shape_cast %10 : vector<8xf32> to vector<8x1xf32>
    %cst_9 = arith.constant 3.200000e+01 : f32
    %12 = vector.broadcast %cst_9 : f32 to vector<8x1xf32>
    %13 = arith.divf %11, %12 : vector<8x1xf32>
    %cst_10 = arith.constant 9.99999997E-7 : f32
    %14 = vector.broadcast %cst_10 : f32 to vector<8x1xf32>
    %15 = arith.addf %13, %14 : vector<8x1xf32>
    %16 = math.rsqrt %15 : vector<8x1xf32>
    %17 = vector.broadcast %16 : vector<8x1xf32> to vector<8x32xf32>
    %18 = arith.mulf %3, %17 : vector<8x32xf32>
    %c0_11 = arith.constant 0 : index
    %c0_12 = arith.constant 0 : index
    %c0_13 = arith.constant 0 : index
    %19 = vector.load %arg5[%c0_11, %c0_12, %c0_13] : memref<1x1x32xf32, #tpu.memory_space<vmem>>, vector<1x1x32xf32>
    %20 = vector.shape_cast %19 : vector<1x1x32xf32> to vector<1x32xf32>
    %21 = vector.broadcast %20 : vector<1x32xf32> to vector<8x32xf32>
    %22 = arith.mulf %18, %21 : vector<8x32xf32>
    %c0_14 = arith.constant 0 : index
    %c0_15 = arith.constant 0 : index
    %c0_16 = arith.constant 0 : index
    %23 = vector.load %arg6[%c0_14, %c0_15, %c0_16] : memref<1x32x96xf32, #tpu.memory_space<vmem>>, vector<1x32x96xf32>
    %24 = vector.shape_cast %23 : vector<1x32x96xf32> to vector<32x96xf32>
    %cst_17 = arith.constant dense<0.000000e+00> : vector<8x96xf32>
    %25 = tpu.matmul %22, %24, %cst_17 {dimension_numbers = #tpu.dot_dimension_numbers<[1], [0], [0], [1], [0, 0, 1, 1], [], []>} : vector<8x32xf32>, vector<32x96xf32>, vector<8x96xf32> -> vector<8x96xf32>
    %26 = vector.extract_strided_slice %25 {offsets = [0, 0], sizes = [8, 8], strides = [1, 1]} : vector<8x96xf32> to vector<8x8xf32>
    %27 = vector.extract_strided_slice %25 {offsets = [0, 8], sizes = [8, 8], strides = [1, 1]} : vector<8x96xf32> to vector<8x8xf32>
    %28 = vector.extract_strided_slice %25 {offsets = [0, 16], sizes = [8, 8], strides = [1, 1]} : vector<8x96xf32> to vector<8x8xf32>
    %29 = vector.extract_strided_slice %25 {offsets = [0, 24], sizes = [8, 8], strides = [1, 1]} : vector<8x96xf32> to vector<8x8xf32>
    %30 = vector.shape_cast %26 : vector<8x8xf32> to vector<1x8x8xf32>
    %31 = vector.shape_cast %27 : vector<8x8xf32> to vector<1x8x8xf32>
    %32 = vector.shape_cast %28 : vector<8x8xf32> to vector<1x8x8xf32>
    %33 = vector.shape_cast %29 : vector<8x8xf32> to vector<1x8x8xf32>
    %34 = tpu.concatenate %30, %31, %32, %33 in 0 : vector<1x8x8xf32>, vector<1x8x8xf32>, vector<1x8x8xf32>, vector<1x8x8xf32> -> vector<4x8x8xf32>
    %35 = vector.extract_strided_slice %25 {offsets = [0, 32], sizes = [8, 8], strides = [1, 1]} : vector<8x96xf32> to vector<8x8xf32>
    %36 = vector.extract_strided_slice %25 {offsets = [0, 40], sizes = [8, 8], strides = [1, 1]} : vector<8x96xf32> to vector<8x8xf32>
    %37 = vector.extract_strided_slice %25 {offsets = [0, 48], sizes = [8, 8], strides = [1, 1]} : vector<8x96xf32> to vector<8x8xf32>
    %38 = vector.extract_strided_slice %25 {offsets = [0, 56], sizes = [8, 8], strides = [1, 1]} : vector<8x96xf32> to vector<8x8xf32>
    %39 = vector.shape_cast %35 : vector<8x8xf32> to vector<1x8x8xf32>
    %40 = vector.shape_cast %36 : vector<8x8xf32> to vector<1x8x8xf32>
    %41 = vector.shape_cast %37 : vector<8x8xf32> to vector<1x8x8xf32>
    %42 = vector.shape_cast %38 : vector<8x8xf32> to vector<1x8x8xf32>
    %43 = tpu.concatenate %39, %40, %41, %42 in 0 : vector<1x8x8xf32>, vector<1x8x8xf32>, vector<1x8x8xf32>, vector<1x8x8xf32> -> vector<4x8x8xf32>
    %44 = vector.extract_strided_slice %25 {offsets = [0, 64], sizes = [8, 8], strides = [1, 1]} : vector<8x96xf32> to vector<8x8xf32>
    %45 = vector.extract_strided_slice %25 {offsets = [0, 72], sizes = [8, 8], strides = [1, 1]} : vector<8x96xf32> to vector<8x8xf32>
    %46 = vector.extract_strided_slice %25 {offsets = [0, 80], sizes = [8, 8], strides = [1, 1]} : vector<8x96xf32> to vector<8x8xf32>
    %47 = vector.extract_strided_slice %25 {offsets = [0, 88], sizes = [8, 8], strides = [1, 1]} : vector<8x96xf32> to vector<8x8xf32>
    %48 = vector.shape_cast %44 : vector<8x8xf32> to vector<1x8x8xf32>
    %49 = vector.shape_cast %45 : vector<8x8xf32> to vector<1x8x8xf32>
    %50 = vector.shape_cast %46 : vector<8x8xf32> to vector<1x8x8xf32>
    %51 = vector.shape_cast %47 : vector<8x8xf32> to vector<1x8x8xf32>
    %52 = tpu.concatenate %48, %49, %50, %51 in 0 : vector<1x8x8xf32>, vector<1x8x8xf32>, vector<1x8x8xf32>, vector<1x8x8xf32> -> vector<4x8x8xf32>
    "tpu.trace_start"() <{level = 10 : i32, message = "hqd,hkd->hqk"}> : () -> ()
    %cst_18 = arith.constant dense<0.000000e+00> : vector<4x8x8xf32>
    %53 = tpu.matmul %34, %43, %cst_18 {dimension_numbers = #tpu.dot_dimension_numbers<[2], [2], [1], [1], [0, 0, 0, 1, 1, 1], [0], [0]>} : vector<4x8x8xf32>, vector<4x8x8xf32>, vector<4x8x8xf32> -> vector<4x8x8xf32>
    "tpu.trace_stop"() : () -> ()
    %54 = arith.addf %53, %5 : vector<4x8x8xf32>
    %55 = vector.broadcast %8 : vector<1x1x8xf32> to vector<4x8x8xf32>
    %56 = arith.addf %54, %55 : vector<4x8x8xf32>
    %cst_19 = arith.constant dense<0xFF800000> : vector<4x8xf32>
    %57 = vector.multi_reduction <maximumf>, %56, %cst_19 [2] : vector<4x8x8xf32> to vector<4x8xf32>
    %58 = vector.shape_cast %57 : vector<4x8xf32> to vector<4x8x1xf32>
    %59 = vector.broadcast %58 : vector<4x8x1xf32> to vector<4x8x8xf32>
    %60 = arith.subf %56, %59 : vector<4x8x8xf32>
    %61 = math.exp %60 : vector<4x8x8xf32>
    %cst_20 = arith.constant dense<0.000000e+00> : vector<4x8xf32>
    %62 = vector.multi_reduction <add>, %61, %cst_20 [2] : vector<4x8x8xf32> to vector<4x8xf32>
    %63 = vector.shape_cast %62 : vector<4x8xf32> to vector<4x8x1xf32>
    %64 = tpu.reciprocal %63 {approx = true} : vector<4x8x1xf32> -> vector<4x8x1xf32>
    %65 = vector.broadcast %64 : vector<4x8x1xf32> to vector<4x8x8xf32>
    %66 = arith.mulf %61, %65 : vector<4x8x8xf32>
    "tpu.trace_start"() <{level = 10 : i32, message = "hqk,hkd->hqd"}> : () -> ()
    %cst_21 = arith.constant dense<0.000000e+00> : vector<4x8x8xf32>
    %67 = tpu.matmul %66, %52, %cst_21 {dimension_numbers = #tpu.dot_dimension_numbers<[2], [1], [1], [2], [0, 0, 0, 1, 1, 2], [0], [0]>} : vector<4x8x8xf32>, vector<4x8x8xf32>, vector<4x8x8xf32> -> vector<4x8x8xf32>
    "tpu.trace_stop"() : () -> ()
    %68 = vector.extract_strided_slice %67 {offsets = [0, 0, 0], sizes = [1, 8, 8], strides = [1, 1, 1]} : vector<4x8x8xf32> to vector<1x8x8xf32>
    %69 = vector.shape_cast %68 : vector<1x8x8xf32> to vector<8x8xf32>
    %70 = vector.extract_strided_slice %67 {offsets = [1, 0, 0], sizes = [1, 8, 8], strides = [1, 1, 1]} : vector<4x8x8xf32> to vector<1x8x8xf32>
    %71 = vector.shape_cast %70 : vector<1x8x8xf32> to vector<8x8xf32>
    %72 = vector.extract_strided_slice %67 {offsets = [2, 0, 0], sizes = [1, 8, 8], strides = [1, 1, 1]} : vector<4x8x8xf32> to vector<1x8x8xf32>
    %73 = vector.shape_cast %72 : vector<1x8x8xf32> to vector<8x8xf32>
    %74 = vector.extract_strided_slice %67 {offsets = [3, 0, 0], sizes = [1, 8, 8], strides = [1, 1, 1]} : vector<4x8x8xf32> to vector<1x8x8xf32>
    %75 = vector.shape_cast %74 : vector<1x8x8xf32> to vector<8x8xf32>
    %76 = tpu.concatenate %69, %71, %73, %75 in 1 : vector<8x8xf32>, vector<8x8xf32>, vector<8x8xf32>, vector<8x8xf32> -> vector<8x32xf32>
    %c0_22 = arith.constant 0 : index
    %c0_23 = arith.constant 0 : index
    %c0_24 = arith.constant 0 : index
    %77 = vector.load %arg7[%c0_22, %c0_23, %c0_24] : memref<1x32x32xf32, #tpu.memory_space<vmem>>, vector<1x32x32xf32>
    %78 = vector.shape_cast %77 : vector<1x32x32xf32> to vector<32x32xf32>
    %cst_25 = arith.constant dense<0.000000e+00> : vector<8x32xf32>
    %79 = tpu.matmul %76, %78, %cst_25 {dimension_numbers = #tpu.dot_dimension_numbers<[1], [0], [0], [1], [0, 0, 1, 1], [], []>} : vector<8x32xf32>, vector<32x32xf32>, vector<8x32xf32> -> vector<8x32xf32>
    %80 = arith.addf %3, %79 : vector<8x32xf32>
    %81 = arith.mulf %80, %80 : vector<8x32xf32>
    %cst_26 = arith.constant dense<0.000000e+00> : vector<8xf32>
    %82 = vector.multi_reduction <add>, %81, %cst_26 [1] : vector<8x32xf32> to vector<8xf32>
    %83 = vector.shape_cast %82 : vector<8xf32> to vector<8x1xf32>
    %cst_27 = arith.constant 3.200000e+01 : f32
    %84 = vector.broadcast %cst_27 : f32 to vector<8x1xf32>
    %85 = arith.divf %83, %84 : vector<8x1xf32>
    %cst_28 = arith.constant 9.99999997E-7 : f32
    %86 = vector.broadcast %cst_28 : f32 to vector<8x1xf32>
    %87 = arith.addf %85, %86 : vector<8x1xf32>
    %88 = math.rsqrt %87 : vector<8x1xf32>
    %89 = vector.broadcast %88 : vector<8x1xf32> to vector<8x32xf32>
    %90 = arith.mulf %80, %89 : vector<8x32xf32>
    %c0_29 = arith.constant 0 : index
    %c0_30 = arith.constant 0 : index
    %c0_31 = arith.constant 0 : index
    %91 = vector.load %arg8[%c0_29, %c0_30, %c0_31] : memref<1x1x32xf32, #tpu.memory_space<vmem>>, vector<1x1x32xf32>
    %92 = vector.shape_cast %91 : vector<1x1x32xf32> to vector<1x32xf32>
    %93 = vector.broadcast %92 : vector<1x32xf32> to vector<8x32xf32>
    %94 = arith.mulf %90, %93 : vector<8x32xf32>
    %c0_32 = arith.constant 0 : index
    %c0_33 = arith.constant 0 : index
    %c0_34 = arith.constant 0 : index
    %95 = vector.load %arg9[%c0_32, %c0_33, %c0_34] : memref<1x32x64xf32, #tpu.memory_space<vmem>>, vector<1x32x64xf32>
    %96 = vector.shape_cast %95 : vector<1x32x64xf32> to vector<32x64xf32>
    %cst_35 = arith.constant dense<0.000000e+00> : vector<8x64xf32>
    %97 = tpu.matmul %94, %96, %cst_35 {dimension_numbers = #tpu.dot_dimension_numbers<[1], [0], [0], [1], [0, 0, 1, 1], [], []>} : vector<8x32xf32>, vector<32x64xf32>, vector<8x64xf32> -> vector<8x64xf32>
    %cst_36 = arith.constant 0.000000e+00 : f32
    %98 = vector.broadcast %cst_36 : f32 to vector<8x64xf32>
    %99 = arith.maximumf %97, %98 : vector<8x64xf32>
    %c0_37 = arith.constant 0 : index
    %c0_38 = arith.constant 0 : index
    %c0_39 = arith.constant 0 : index
    %100 = vector.load %arg10[%c0_37, %c0_38, %c0_39] : memref<1x64x32xf32, #tpu.memory_space<vmem>>, vector<1x64x32xf32>
    %101 = vector.shape_cast %100 : vector<1x64x32xf32> to vector<64x32xf32>
    %cst_40 = arith.constant dense<0.000000e+00> : vector<8x32xf32>
    %102 = tpu.matmul %99, %101, %cst_40 {dimension_numbers = #tpu.dot_dimension_numbers<[1], [0], [0], [1], [0, 0, 1, 1], [], []>} : vector<8x64xf32>, vector<64x32xf32>, vector<8x32xf32> -> vector<8x32xf32>
    %103 = arith.addf %80, %102 : vector<8x32xf32>
    %c0_41 = arith.constant 0 : index
    %c0_42 = arith.constant 0 : index
    %104 = vector.load %arg15[%c0_41, %c0_42] : memref<8x32xf32, #tpu.memory_space<vmem>>, vector<8x32xf32>
    tpu.vector_store %arg15[%c0_41, %c0_42], %103 {strides = array<i32>} : memref<8x32xf32, #tpu.memory_space<vmem>>, vector<8x32xf32>,
    %c1_i32 = arith.constant 1 : i32
    %105 = arith.cmpi eq, %arg1, %c1_i32 : i32
    %106 = arith.extui %105 : i1 to i32
    %c0_i32_43 = arith.constant 0 : i32
    %107 = arith.cmpi ne, %106, %c0_i32_43 : i32
    scf.if %107 {
      %108 = vector.extract_strided_slice %103 {offsets = [0, 0], sizes = [1, 32], strides = [1, 1]} : vector<8x32xf32> to vector<1x32xf32>
      %109 = arith.mulf %108, %108 : vector<1x32xf32>
      %cst_44 = arith.constant dense<0.000000e+00> : vector<1xf32>
      %110 = vector.multi_reduction <add>, %109, %cst_44 [1] : vector<1x32xf32> to vector<1xf32>
      %111 = vector.shape_cast %110 : vector<1xf32> to vector<1x1xf32>
      %cst_45 = arith.constant 3.200000e+01 : f32
      %112 = vector.broadcast %cst_45 : f32 to vector<1x1xf32>
      %113 = arith.divf %111, %112 : vector<1x1xf32>
      %cst_46 = arith.constant 9.99999997E-7 : f32
      %114 = vector.broadcast %cst_46 : f32 to vector<1x1xf32>
      %115 = arith.addf %113, %114 : vector<1x1xf32>
      %116 = math.rsqrt %115 : vector<1x1xf32>
      %117 = vector.broadcast %116 : vector<1x1xf32> to vector<1x32xf32>
      %118 = arith.mulf %108, %117 : vector<1x32xf32>
      %c0_47 = arith.constant 0 : index
      %c0_48 = arith.constant 0 : index
      %119 = vector.load %arg11[%c0_47, %c0_48] : memref<1x32xf32, #tpu.memory_space<vmem>>, vector<1x32xf32>
      %120 = arith.mulf %118, %119 : vector<1x32xf32>
      %c0_49 = arith.constant 0 : index
      %c0_50 = arith.constant 0 : index
      %121 = vector.load %arg12[%c0_49, %c0_50] : memref<32x2xf32, #tpu.memory_space<vmem>>, vector<32x2xf32>
      %cst_51 = arith.constant dense<0.000000e+00> : vector<1x2xf32>
      %122 = tpu.matmul %120, %121, %cst_51 {dimension_numbers = #tpu.dot_dimension_numbers<[1], [0], [0], [1], [0, 0, 1, 1], [], []>} : vector<1x32xf32>, vector<32x2xf32>, vector<1x2xf32> -> vector<1x2xf32>
      %c0_52 = arith.constant 0 : index
      %c0_53 = arith.constant 0 : index
      %123 = vector.load %arg13[%c0_52, %c0_53] : memref<1x2xf32, #tpu.memory_space<vmem>>, vector<1x2xf32>
      %124 = arith.addf %122, %123 : vector<1x2xf32>
      %c0_54 = arith.constant 0 : index
      %c0_55 = arith.constant 0 : index
      %c0_56 = arith.constant 0 : index
      %125 = vector.load %arg14[%c0_54, %c0_55, %c0_56] : memref<1x1x2xf32, #tpu.memory_space<vmem>>, vector<1x1x2xf32>
      %126 = vector.shape_cast %125 : vector<1x1x2xf32> to vector<1x2xf32>
      %127 = vector.shape_cast %124 : vector<1x2xf32> to vector<1x1x2xf32>
      tpu.vector_store %arg14[%c0_54, %c0_55, %c0_56], %127 {strides = array<i32>} : memref<1x1x2xf32, #tpu.memory_space<vmem>>, vector<1x1x2xf32>,
    } else {
    }
    return
  }
  func.func @transform_0(%arg0: i32, %arg1: i32) -> (i32, i32, i32) {
    %c0_i32 = arith.constant 0 : i32
    %c0_i32_0 = arith.constant 0 : i32
    %c0_i32_1 = arith.constant 0 : i32
    return %arg0, %c0_i32, %c0_i32_0 : i32, i32, i32
  }
  func.func @transform_1(%arg0: i32, %arg1: i32) -> (i32, i32, i32, i32) {
    %c0_i32 = arith.constant 0 : i32
    %c0_i32_0 = arith.constant 0 : i32
    %c0_i32_1 = arith.constant 0 : i32
    %c0_i32_2 = arith.constant 0 : i32
    %c0_i32_3 = arith.constant 0 : i32
    return %c0_i32, %c0_i32_0, %c0_i32_1, %c0_i32_2 : i32, i32, i32, i32
  }
  func.func @transform_2(%arg0: i32, %arg1: i32) -> (i32, i32, i32) {
    %c0_i32 = arith.constant 0 : i32
    %c0_i32_0 = arith.constant 0 : i32
    %c0_i32_1 = arith.constant 0 : i32
    return %arg0, %c0_i32, %c0_i32_0 : i32, i32, i32
  }
  func.func @transform_3(%arg0: i32, %arg1: i32) -> (i32, i32, i32) {
    %c0_i32 = arith.constant 0 : i32
    %c0_i32_0 = arith.constant 0 : i32
    %c0_i32_1 = arith.constant 0 : i32
    return %arg1, %c0_i32, %c0_i32_0 : i32, i32, i32
  }
  func.func @transform_4(%arg0: i32, %arg1: i32) -> (i32, i32, i32) {
    %c0_i32 = arith.constant 0 : i32
    %c0_i32_0 = arith.constant 0 : i32
    %c0_i32_1 = arith.constant 0 : i32
    return %arg1, %c0_i32, %c0_i32_0 : i32, i32, i32
  }
  func.func @transform_5(%arg0: i32, %arg1: i32) -> (i32, i32, i32) {
    %c0_i32 = arith.constant 0 : i32
    %c0_i32_0 = arith.constant 0 : i32
    %c0_i32_1 = arith.constant 0 : i32
    return %arg1, %c0_i32, %c0_i32_0 : i32, i32, i32
  }
  func.func @transform_6(%arg0: i32, %arg1: i32) -> (i32, i32, i32) {
    %c0_i32 = arith.constant 0 : i32
    %c0_i32_0 = arith.constant 0 : i32
    %c0_i32_1 = arith.constant 0 : i32
    return %arg1, %c0_i32, %c0_i32_0 : i32, i32, i32
  }
  func.func @transform_7(%arg0: i32, %arg1: i32) -> (i32, i32, i32) {
    %c0_i32 = arith.constant 0 : i32
    %c0_i32_0 = arith.constant 0 : i32
    %c0_i32_1 = arith.constant 0 : i32
    return %arg1, %c0_i32, %c0_i32_0 : i32, i32, i32
  }
  func.func @transform_8(%arg0: i32, %arg1: i32) -> (i32, i32, i32) {
    %c0_i32 = arith.constant 0 : i32
    %c0_i32_0 = arith.constant 0 : i32
    %c0_i32_1 = arith.constant 0 : i32
    return %arg1, %c0_i32, %c0_i32_0 : i32, i32, i32
  }
  func.func @transform_9(%arg0: i32, %arg1: i32) -> (i32, i32) {
    %c0_i32 = arith.constant 0 : i32
    %c0_i32_0 = arith.constant 0 : i32
    %c0_i32_1 = arith.constant 0 : i32
    return %c0_i32, %c0_i32_0 : i32, i32
  }
  func.func @transform_10(%arg0: i32, %arg1: i32) -> (i32, i32) {
    %c0_i32 = arith.constant 0 : i32
    %c0_i32_0 = arith.constant 0 : i32
    %c0_i32_1 = arith.constant 0 : i32
    return %c0_i32, %c0_i32_0 : i32, i32
  }
  func.func @transform_11(%arg0: i32, %arg1: i32) -> (i32, i32) {
    %c0_i32 = arith.constant 0 : i32
    %c0_i32_0 = arith.constant 0 : i32
    %c0_i32_1 = arith.constant 0 : i32
    return %c0_i32, %c0_i32_0 : i32, i32
  }
  func.func @transform_12(%arg0: i32, %arg1: i32) -> (i32, i32, i32) {
    %c0_i32 = arith.constant 0 : i32
    %c0_i32_0 = arith.constant 0 : i32
    %c0_i32_1 = arith.constant 0 : i32
    return %arg0, %c0_i32, %c0_i32_0 : i32, i32, i32
  }
}

</mosaic_0001>

<llo_original>
// kernel: t5_encoder_classifier_forward.1
$region0: #{t5_encoder_classifier_forward.1}
  #allocation0 [shape = 'u32[]', space=smem, size = 0x4, offset = 0x4, fixed_abs, tag = 'smem constant byte address 0x4 - core index']
  #allocation1 [shape = 'u32[144,128]{1,0:T(1,128)}', space=vmem, size = 0x12000, scoped, tag = 'internal scratch']
  #allocation2 [shape = 'f32[8,32]{1,0:T(8,128)}', space=vmem, size = 0x1000, scoped, tag = 'scratch operand']
  %s0 = inlined_call_operand.vmem [shape: f32[2,8,32], index: 0, kind: input, shape index: {}]
  %s1 = inlined_call_operand.vmem [shape: f32[1,4,8,8], index: 1, kind: input, shape index: {}]
  %s2 = inlined_call_operand.vmem [shape: f32[2,1,8], index: 2, kind: input, shape index: {}]
  %s3 = inlined_call_operand.vmem [shape: f32[2,1,32], index: 3, kind: input, shape index: {}]
  %s4 = inlined_call_operand.vmem [shape: f32[2,32,96], index: 4, kind: input, shape index: {}]
  %s5 = inlined_call_operand.vmem [shape: f32[2,32,32], index: 5, kind: input, shape index: {}]
  %s6 = inlined_call_operand.vmem [shape: f32[2,1,32], index: 6, kind: input, shape index: {}]
  %s7 = inlined_call_operand.vmem [shape: f32[2,32,64], index: 7, kind: input, shape index: {}]
  %s8 = inlined_call_operand.vmem [shape: f32[2,64,32], index: 8, kind: input, shape index: {}]
  %s9 = inlined_call_operand.vmem [shape: f32[1,32], index: 9, kind: input, shape index: {}]
  %s10 = inlined_call_operand.vmem [shape: f32[32,2], index: 10, kind: input, shape index: {}]
  %s11 = inlined_call_operand.vmem [shape: f32[1,2], index: 11, kind: input, shape index: {}]
  %s12 = inlined_call_operand.hbm [shape: f32[2,1,2], index: 12, kind: output, shape index: {}]
  %s13 = sld [smem:[#allocation0]]
  $region89: #{t5_encoder_classifier_forward.1} parent=0
    _
  %s15 = ssub.s32 1, %s13
  %s16 = scalar_select 0, %s15, %s13
  $region1: #{t5_encoder_classifier_forward.1} parent=0
    #allocation3 [shape = 'u8[1024]{0}', space=vmem, size = 0x400, scoped, tag = 'output window, operand 0']
    #allocation4 [shape = 's32[2]{0}', space=sflag, size = 0x8, scoped, tag = 'scoped memory for t5_encoder_classifier_forward.1']
    %17 = vsyncpa [#allocation4], 0
    %s18 = scalar_lea.sflag [#allocation4], 1
    %19 = vsyncpa %s18, 0
    loop: start=0, step=1, limit=6
    $region2: #{t5_encoder_classifier_forward.1} parent=1 // loop_pre_header
      _
    $region3: #{t5_encoder_classifier_forward.1} parent=1 // loop_header
      %s21 = sphi 0, %s25
      %p22 = scmp.ge.s32.totalorder %s21, 6
      %s28 = sphi 0, %s40
      %s29 = sphi 0, %s36
      %s30 = sphi 0, %s28
      %s31 = sphi 0, %s29
      %s32 = sphi 0, %s30
      %s33 = sphi 0, %s31
      %s43 = sphi 0, %s45
      %s46 = sphi 0, %s43
      %s47 = sphi 0, %s46
      %s63 = sphi 0, %s47
      %s67 = sphi 0, %s67
      %s69 = sphi 0, %s67
      %s70 = sphi 0, %s69
      %s84 = sphi 0, %s70
      %s90 = sphi 0, %s92
      %s93 = sphi 0, %s90
      %s94 = sphi 0, %s93
      %s110 = sphi 0, %s94
      %s116 = sphi 0, %s118
      %s119 = sphi 0, %s116
      %s120 = sphi 0, %s119
      %s136 = sphi 0, %s120
      %s142 = sphi 0, %s144
      %s145 = sphi 0, %s142
      %s146 = sphi 0, %s145
      %s162 = sphi 0, %s146
      %s168 = sphi 0, %s170
      %s171 = sphi 0, %s168
      %s172 = sphi 0, %s171
      %s188 = sphi 0, %s172
      %s194 = sphi 0, %s196
      %s197 = sphi 0, %s194
      %s198 = sphi 0, %s197
      %s214 = sphi 0, %s198
      %s220 = sphi 0, %s222
      %s223 = sphi 0, %s220
      %s224 = sphi 0, %s223
      %s240 = sphi 0, %s224
      %s246 = sphi 0, %s248
      %s249 = sphi 0, %s246
      %s250 = sphi 0, %s249
      %s266 = sphi 0, %s250
      %s270 = sphi 0, %s270
      %s272 = sphi 0, %s270
      %s273 = sphi 0, %s272
      %s287 = sphi 0, %s273
      %s291 = sphi 0, %s291
      %s293 = sphi 0, %s291
      %s294 = sphi 0, %s293
      %s308 = sphi 0, %s294
      %s312 = sphi 0, %s312
      %s314 = sphi 0, %s312
      %s315 = sphi 0, %s314
      %s329 = sphi 0, %s315
      %s335 = sphi 0, %s337
      %s338 = sphi 0, %s335
      %s339 = sphi 0, %s338
      %s355 = sphi 0, %s339
    $region4: #{t5_encoder_classifier_forward.1} parent=1 // loop_header_branch
      %24 = sbr.rel (%p22) target = $region8
    $region5: #{t5_encoder_classifier_forward.1} parent=1 // loop_body
      %s26 = ssub.s32 %s21, 1
      %s27 = ssub.s32 %s21, 2
      %s34 = sadd.s32 1, %s29
      %p35 = scmp.ge.s32.totalorder %s34, 2
      %s36 = scalar_select %p35, 0, %s34
      %s37 = sadd.s32 1, %s28
      %s38 = scalar_select %p35, %s37, %s28
      %p39 = scmp.ge.s32.totalorder %s38, 2
      %s40 = scalar_select %p39, 0, %s38
      %s41 = ssub.s32 %s28, %s40
      %p42 = scmp.eq.s32.totalorder %s41, 0
      %s44 = sadd.s32 %s43, 1
      %s45 = scalar_select %p42, %s43, %s44
      %p48 = pneg %p42
      %p49 = scmp.eq.s32.totalorder %s21, 3
      %p50 = por %p48, %p49
      %p51 = scmp.ne.s32.totalorder %s43, %s46
      %p52 = scmp.eq.s32.totalorder %s21, 0
      %p53 = por %p51, %p52
      %p54 = scmp.ne.s32.totalorder %s43, %s46
      %p55 = scmp.eq.s32.totalorder %s26, 3
      %p56 = por %p54, %p55
      %p57 = scmp.ne.s32.totalorder %s46, %s47
      %p58 = scmp.eq.s32.totalorder %s26, 0
      %p59 = por %p57, %p58
      %p60 = scmp.ne.s32.totalorder %s46, %s47
      %p61 = scmp.eq.s32.totalorder %s27, 3
      %p62 = por %p60, %p61
      %p64 = scmp.ne.s32.totalorder %s47, %s63
      %p65 = scmp.eq.s32.totalorder %s27, 0
      %p66 = por %p64, %p65
      %s68 = sadd.s32 %s67, 1
      %p71 = scmp.eq.s32.totalorder %s21, 3
      %p72 = scmp.ne.s32.totalorder %s67, %s69
      %p73 = scmp.eq.s32.totalorder %s21, 0
      %p74 = por %p72, %p73
      %p75 = scmp.ne.s32.totalorder %s67, %s69
      %p76 = scmp.eq.s32.totalorder %s26, 3
      %p77 = por %p75, %p76
      %p78 = scmp.ne.s32.totalorder %s69, %s70
      %p79 = scmp.eq.s32.totalorder %s26, 0
      %p80 = por %p78, %p79
      %p81 = scmp.ne.s32.totalorder %s69, %s70
      %p82 = scmp.eq.s32.totalorder %s27, 3
      %p83 = por %p81, %p82
      %p85 = scmp.ne.s32.totalorder %s70, %s84
      %p86 = scmp.eq.s32.totalorder %s27, 0
      %p87 = por %p85, %p86
      %s88 = ssub.s32 %s28, %s40
      %p89 = scmp.eq.s32.totalorder %s88, 0
      %s91 = sadd.s32 %s90, 1
      %s92 = scalar_select %p89, %s90, %s91
      %p95 = pneg %p89
      %p96 = scmp.eq.s32.totalorder %s21, 3
      %p97 = por %p95, %p96
      %p98 = scmp.ne.s32.totalorder %s90, %s93
      %p99 = scmp.eq.s32.totalorder %s21, 0
      %p100 = por %p98, %p99
      %p101 = scmp.ne.s32.totalorder %s90, %s93
      %p102 = scmp.eq.s32.totalorder %s26, 3
      %p103 = por %p101, %p102
      %p104 = scmp.ne.s32.totalorder %s93, %s94
      %p105 = scmp.eq.s32.totalorder %s26, 0
      %p106 = por %p104, %p105
      %p107 = scmp.ne.s32.totalorder %s93, %s94
      %p108 = scmp.eq.s32.totalorder %s27, 3
      %p109 = por %p107, %p108
      %p111 = scmp.ne.s32.totalorder %s94, %s110
      %p112 = scmp.eq.s32.totalorder %s27, 0
      %p113 = por %p111, %p112
      %s114 = ssub.s32 %s29, %s36
      %p115 = scmp.eq.s32.totalorder %s114, 0
      %s117 = sadd.s32 %s116, 1
      %s118 = scalar_select %p115, %s116, %s117
      %p121 = pneg %p115
      %p122 = scmp.eq.s32.totalorder %s21, 3
      %p123 = por %p121, %p122
      %p124 = scmp.ne.s32.totalorder %s116, %s119
      %p125 = scmp.eq.s32.totalorder %s21, 0
      %p126 = por %p124, %p125
      %p127 = scmp.ne.s32.totalorder %s116, %s119
      %p128 = scmp.eq.s32.totalorder %s26, 3
      %p129 = por %p127, %p128
      %p130 = scmp.ne.s32.totalorder %s119, %s120
      %p131 = scmp.eq.s32.totalorder %s26, 0
      %p132 = por %p130, %p131
      %p133 = scmp.ne.s32.totalorder %s119, %s120
      %p134 = scmp.eq.s32.totalorder %s27, 3
      %p135 = por %p133, %p134
      %p137 = scmp.ne.s32.totalorder %s120, %s136
      %p138 = scmp.eq.s32.totalorder %s27, 0
      %p139 = por %p137, %p138
      %s140 = ssub.s32 %s29, %s36
      %p141 = scmp.eq.s32.totalorder %s140, 0
      %s143 = sadd.s32 %s142, 1
      %s144 = scalar_select %p141, %s142, %s143
      %p147 = pneg %p141
      %p148 = scmp.eq.s32.totalorder %s21, 3
      %p149 = por %p147, %p148
      %p150 = scmp.ne.s32.totalorder %s142, %s145
      %p151 = scmp.eq.s32.totalorder %s21, 0
      %p152 = por %p150, %p151
      %p153 = scmp.ne.s32.totalorder %s142, %s145
      %p154 = scmp.eq.s32.totalorder %s26, 3
      %p155 = por %p153, %p154
      %p156 = scmp.ne.s32.totalorder %s145, %s146
      %p157 = scmp.eq.s32.totalorder %s26, 0
      %p158 = por %p156, %p157
      %p159 = scmp.ne.s32.totalorder %s145, %s146
      %p160 = scmp.eq.s32.totalorder %s27, 3
      %p161 = por %p159, %p160
      %p163 = scmp.ne.s32.totalorder %s146, %s162
      %p164 = scmp.eq.s32.totalorder %s27, 0
      %p165 = por %p163, %p164
      %s166 = ssub.s32 %s29, %s36
      %p167 = scmp.eq.s32.totalorder %s166, 0
      %s169 = sadd.s32 %s168, 1
      %s170 = scalar_select %p167, %s168, %s169
      %p173 = pneg %p167
      %p174 = scmp.eq.s32.totalorder %s21, 3
      %p175 = por %p173, %p174
      %p176 = scmp.ne.s32.totalorder %s168, %s171
      %p177 = scmp.eq.s32.totalorder %s21, 0
      %p178 = por %p176, %p177
      %p179 = scmp.ne.s32.totalorder %s168, %s171
      %p180 = scmp.eq.s32.totalorder %s26, 3
      %p181 = por %p179, %p180
      %p182 = scmp.ne.s32.totalorder %s171, %s172
      %p183 = scmp.eq.s32.totalorder %s26, 0
      %p184 = por %p182, %p183
      %p185 = scmp.ne.s32.totalorder %s171, %s172
      %p186 = scmp.eq.s32.totalorder %s27, 3
      %p187 = por %p185, %p186
      %p189 = scmp.ne.s32.totalorder %s172, %s188
      %p190 = scmp.eq.s32.totalorder %s27, 0
      %p191 = por %p189, %p190
      %s192 = ssub.s32 %s29, %s36
      %p193 = scmp.eq.s32.totalorder %s192, 0
      %s195 = sadd.s32 %s194, 1
      %s196 = scalar_select %p193, %s194, %s195
      %p199 = pneg %p193
      %p200 = scmp.eq.s32.totalorder %s21, 3
      %p201 = por %p199, %p200
      %p202 = scmp.ne.s32.totalorder %s194, %s197
      %p203 = scmp.eq.s32.totalorder %s21, 0
      %p204 = por %p202, %p203
      %p205 = scmp.ne.s32.totalorder %s194, %s197
      %p206 = scmp.eq.s32.totalorder %s26, 3
      %p207 = por %p205, %p206
      %p208 = scmp.ne.s32.totalorder %s197, %s198
      %p209 = scmp.eq.s32.totalorder %s26, 0
      %p210 = por %p208, %p209
      %p211 = scmp.ne.s32.totalorder %s197, %s198
      %p212 = scmp.eq.s32.totalorder %s27, 3
      %p213 = por %p211, %p212
      %p215 = scmp.ne.s32.totalorder %s198, %s214
      %p216 = scmp.eq.s32.totalorder %s27, 0
      %p217 = por %p215, %p216
      %s218 = ssub.s32 %s29, %s36
      %p219 = scmp.eq.s32.totalorder %s218, 0
      %s221 = sadd.s32 %s220, 1
      %s222 = scalar_select %p219, %s220, %s221
      %p225 = pneg %p219
      %p226 = scmp.eq.s32.totalorder %s21, 3
      %p227 = por %p225, %p226
      %p228 = scmp.ne.s32.totalorder %s220, %s223
      %p229 = scmp.eq.s32.totalorder %s21, 0
      %p230 = por %p228, %p229
      %p231 = scmp.ne.s32.totalorder %s220, %s223
      %p232 = scmp.eq.s32.totalorder %s26, 3
      %p233 = por %p231, %p232
      %p234 = scmp.ne.s32.totalorder %s223, %s224
      %p235 = scmp.eq.s32.totalorder %s26, 0
      %p236 = por %p234, %p235
      %p237 = scmp.ne.s32.totalorder %s223, %s224
      %p238 = scmp.eq.s32.totalorder %s27, 3
      %p239 = por %p237, %p238
      %p241 = scmp.ne.s32.totalorder %s224, %s240
      %p242 = scmp.eq.s32.totalorder %s27, 0
      %p243 = por %p241, %p242
      %s244 = ssub.s32 %s29, %s36
      %p245 = scmp.eq.s32.totalorder %s244, 0
      %s247 = sadd.s32 %s246, 1
      %s248 = scalar_select %p245, %s246, %s247
      %p251 = pneg %p245
      %p252 = scmp.eq.s32.totalorder %s21, 3
      %p253 = por %p251, %p252
      %p254 = scmp.ne.s32.totalorder %s246, %s249
      %p255 = scmp.eq.s32.totalorder %s21, 0
      %p256 = por %p254, %p255
      %p257 = scmp.ne.s32.totalorder %s246, %s249
      %p258 = scmp.eq.s32.totalorder %s26, 3
      %p259 = por %p257, %p258
      %p260 = scmp.ne.s32.totalorder %s249, %s250
      %p261 = scmp.eq.s32.totalorder %s26, 0
      %p262 = por %p260, %p261
      %p263 = scmp.ne.s32.totalorder %s249, %s250
      %p264 = scmp.eq.s32.totalorder %s27, 3
      %p265 = por %p263, %p264
      %p267 = scmp.ne.s32.totalorder %s250, %s266
      %p268 = scmp.eq.s32.totalorder %s27, 0
      %p269 = por %p267, %p268
      %s271 = sadd.s32 %s270, 1
      %p274 = scmp.eq.s32.totalorder %s21, 3
      %p275 = scmp.ne.s32.totalorder %s270, %s272
      %p276 = scmp.eq.s32.totalorder %s21, 0
      %p277 = por %p275, %p276
      %p278 = scmp.ne.s32.totalorder %s270, %s272
      %p279 = scmp.eq.s32.totalorder %s26, 3
      %p280 = por %p278, %p279
      %p281 = scmp.ne.s32.totalorder %s272, %s273
      %p282 = scmp.eq.s32.totalorder %s26, 0
      %p283 = por %p281, %p282
      %p284 = scmp.ne.s32.totalorder %s272, %s273
      %p285 = scmp.eq.s32.totalorder %s27, 3
      %p286 = por %p284, %p285
      %p288 = scmp.ne.s32.totalorder %s273, %s287
      %p289 = scmp.eq.s32.totalorder %s27, 0
      %p290 = por %p288, %p289
      %s292 = sadd.s32 %s291, 1
      %p295 = scmp.eq.s32.totalorder %s21, 3
      %p296 = scmp.ne.s32.totalorder %s291, %s293
      %p297 = scmp.eq.s32.totalorder %s21, 0
      %p298 = por %p296, %p297
      %p299 = scmp.ne.s32.totalorder %s291, %s293
      %p300 = scmp.eq.s32.totalorder %s26, 3
      %p301 = por %p299, %p300
      %p302 = scmp.ne.s32.totalorder %s293, %s294
      %p303 = scmp.eq.s32.totalorder %s26, 0
      %p304 = por %p302, %p303
      %p305 = scmp.ne.s32.totalorder %s293, %s294
      %p306 = scmp.eq.s32.totalorder %s27, 3
      %p307 = por %p305, %p306
      %p309 = scmp.ne.s32.totalorder %s294, %s308
      %p310 = scmp.eq.s32.totalorder %s27, 0
      %p311 = por %p309, %p310
      %s313 = sadd.s32 %s312, 1
      %p316 = scmp.eq.s32.totalorder %s21, 3
      %p317 = scmp.ne.s32.totalorder %s312, %s314
      %p318 = scmp.eq.s32.totalorder %s21, 0
      %p319 = por %p317, %p318
      %p320 = scmp.ne.s32.totalorder %s312, %s314
      %p321 = scmp.eq.s32.totalorder %s26, 3
      %p322 = por %p320, %p321
      %p323 = scmp.ne.s32.totalorder %s314, %s315
      %p324 = scmp.eq.s32.totalorder %s26, 0
      %p325 = por %p323, %p324
      %p326 = scmp.ne.s32.totalorder %s314, %s315
      %p327 = scmp.eq.s32.totalorder %s27, 3
      %p328 = por %p326, %p327
      %p330 = scmp.ne.s32.totalorder %s315, %s329
      %p331 = scmp.eq.s32.totalorder %s27, 0
      %p332 = por %p330, %p331
      %s333 = ssub.s32 %s28, %s40
      %p334 = scmp.eq.s32.totalorder %s333, 0
      %s336 = sadd.s32 %s335, 1
      %s337 = scalar_select %p334, %s335, %s336
      %p340 = pneg %p334
      %p341 = scmp.eq.s32.totalorder %s21, 3
      %p342 = por %p340, %p341
      %p343 = scmp.ne.s32.totalorder %s335, %s338
      %p344 = scmp.eq.s32.totalorder %s21, 0
      %p345 = por %p343, %p344
      %p346 = scmp.ne.s32.totalorder %s335, %s338
      %p347 = scmp.eq.s32.totalorder %s26, 3
      %p348 = por %p346, %p347
      %p349 = scmp.ne.s32.totalorder %s338, %s339
      %p350 = scmp.eq.s32.totalorder %s26, 0
      %p351 = por %p349, %p350
      %p352 = scmp.ne.s32.totalorder %s338, %s339
      %p353 = scmp.eq.s32.totalorder %s27, 3
      %p354 = por %p352, %p353
      %p356 = scmp.ne.s32.totalorder %s339, %s355
      %p357 = scmp.eq.s32.totalorder %s27, 0
      %p358 = por %p356, %p357
      %p359 = scmp.le.s32.totalorder 1, %s21
      %p360 = scmp.lt.s32.totalorder %s21, 5
      %p361 = pnand %p359, %p360
      %p362 = pneg %p361
      // Predicated region
      $region9: #{t5_encoder_classifier_forward.1} parent=5 // pred_check
        _
      $region10: #{t5_encoder_classifier_forward.1} parent=5 // pred_check_branch
        %364 = sbr.rel (%p361) target = $region12
      $region11: #{t5_encoder_classifier_forward.1} parent=5 // pred_region
        %s365 = ssub.s32 %s21, 1
        // Predicated region
        $region13: #{t5_encoder_classifier_forward.1} parent=11 // pred_check
          %p366 = pneg %p80
        $region14: #{t5_encoder_classifier_forward.1} parent=11 // pred_check_branch
          %368 = sbr.rel (%p366) target = $region16
        $region15: #{t5_encoder_classifier_forward.1} parent=11 // pred_region
          _
        $region16: #{t5_encoder_classifier_forward.1} parent=11 // pred_fallthru
          _
        // Predicated region
        $region17: #{t5_encoder_classifier_forward.1} parent=11 // pred_check
          %p369 = pneg %p283
        $region18: #{t5_encoder_classifier_forward.1} parent=11 // pred_check_branch
          %371 = sbr.rel (%p369) target = $region20
        $region19: #{t5_encoder_classifier_forward.1} parent=11 // pred_region
          _
        $region20: #{t5_encoder_classifier_forward.1} parent=11 // pred_fallthru
          _
        // Predicated region
        $region21: #{t5_encoder_classifier_forward.1} parent=11 // pred_check
          %p372 = pneg %p304
        $region22: #{t5_encoder_classifier_forward.1} parent=11 // pred_check_branch
          %374 = sbr.rel (%p372) target = $region24
        $region23: #{t5_encoder_classifier_forward.1} parent=11 // pred_region
          _
        $region24: #{t5_encoder_classifier_forward.1} parent=11 // pred_fallthru
          _
        // Predicated region
        $region25: #{t5_encoder_classifier_forward.1} parent=11 // pred_check
          %p375 = pneg %p325
        $region26: #{t5_encoder_classifier_forward.1} parent=11 // pred_check_branch
          %377 = sbr.rel (%p375) target = $region28
        $region27: #{t5_encoder_classifier_forward.1} parent=11 // pred_region
          _
        $region28: #{t5_encoder_classifier_forward.1} parent=11 // pred_fallthru
          _
      $region12: #{t5_encoder_classifier_forward.1} parent=5 // pred_fallthru
        _
      %p378 = scmp.lt.s32.totalorder %s21, 4
      // Predicated region
      $region29: #{t5_encoder_classifier_forward.1} parent=5 // pred_check
        %p379 = pneg %p378
      $region30: #{t5_encoder_classifier_forward.1} parent=5 // pred_check_branch
        %381 = sbr.rel (%p379) target = $region32
      $region31: #{t5_encoder_classifier_forward.1} parent=5 // pred_region
        // Predicated region
        $region33: #{t5_encoder_classifier_forward.1} parent=31 // pred_check
          %p382 = pneg %p53
        $region34: #{t5_encoder_classifier_forward.1} parent=31 // pred_check_branch
          %384 = sbr.rel (%p382) target = $region36
        $region35: #{t5_encoder_classifier_forward.1} parent=31 // pred_region
          %p385 = scmp.lt.s32.totalorder %s28, 1
          %s386 = scalar_select %p385, %s28, 1
          %s387 = smul.addr %s386, 8
          %s388 = scalar_lea.vmem %s0, %s387
        $region36: #{t5_encoder_classifier_forward.1} parent=31 // pred_fallthru
          _
        // Predicated region
        $region37: #{t5_encoder_classifier_forward.1} parent=31 // pred_check
          %p389 = pneg %p100
        $region38: #{t5_encoder_classifier_forward.1} parent=31 // pred_check_branch
          %391 = sbr.rel (%p389) target = $region40
        $region39: #{t5_encoder_classifier_forward.1} parent=31 // pred_region
          %p392 = scmp.lt.s32.totalorder %s28, 1
          %s393 = scalar_select %p392, %s28, 1
          %s394 = scalar_lea.vmem %s2, %s393
        $region40: #{t5_encoder_classifier_forward.1} parent=31 // pred_fallthru
          _
        // Predicated region
        $region41: #{t5_encoder_classifier_forward.1} parent=31 // pred_check
          %p395 = pneg %p126
        $region42: #{t5_encoder_classifier_forward.1} parent=31 // pred_check_branch
          %397 = sbr.rel (%p395) target = $region44
        $region43: #{t5_encoder_classifier_forward.1} parent=31 // pred_region
          %p398 = scmp.lt.s32.totalorder %s29, 1
          %s399 = scalar_select %p398, %s29, 1
          %s400 = scalar_lea.vmem %s3, %s399
        $region44: #{t5_encoder_classifier_forward.1} parent=31 // pred_fallthru
          _
        // Predicated region
        $region45: #{t5_encoder_classifier_forward.1} parent=31 // pred_check
          %p401 = pneg %p152
        $region46: #{t5_encoder_classifier_forward.1} parent=31 // pred_check_branch
          %403 = sbr.rel (%p401) target = $region48
        $region47: #{t5_encoder_classifier_forward.1} parent=31 // pred_region
          %p404 = scmp.lt.s32.totalorder %s29, 1
          %s405 = scalar_select %p404, %s29, 1
          %s406 = smul.addr %s405, 4
          %s407 = smul.addr %s406, 8
          %s408 = scalar_lea.vmem %s4, %s407
        $region48: #{t5_encoder_classifier_forward.1} parent=31 // pred_fallthru
          _
        // Predicated region
        $region49: #{t5_encoder_classifier_forward.1} parent=31 // pred_check
          %p409 = pneg %p178
        $region50: #{t5_encoder_classifier_forward.1} parent=31 // pred_check_branch
          %411 = sbr.rel (%p409) target = $region52
        $region51: #{t5_encoder_classifier_forward.1} parent=31 // pred_region
          %p412 = scmp.lt.s32.totalorder %s29, 1
          %s413 = scalar_select %p412, %s29, 1
          %s414 = smul.addr %s413, 4
          %s415 = smul.addr %s414, 8
          %s416 = scalar_lea.vmem %s5, %s415
        $region52: #{t5_encoder_classifier_forward.1} parent=31 // pred_fallthru
          _
        // Predicated region
        $region53: #{t5_encoder_classifier_forward.1} parent=31 // pred_check
          %p417 = pneg %p204
        $region54: #{t5_encoder_classifier_forward.1} parent=31 // pred_check_branch
          %419 = sbr.rel (%p417) target = $region56
        $region55: #{t5_encoder_classifier_forward.1} parent=31 // pred_region
          %p420 = scmp.lt.s32.totalorder %s29, 1
          %s421 = scalar_select %p420, %s29, 1
          %s422 = scalar_lea.vmem %s6, %s421
        $region56: #{t5_encoder_classifier_forward.1} parent=31 // pred_fallthru
          _
        // Predicated region
        $region57: #{t5_encoder_classifier_forward.1} parent=31 // pred_check
          %p423 = pneg %p230
        $region58: #{t5_encoder_classifier_forward.1} parent=31 // pred_check_branch
          %425 = sbr.rel (%p423) target = $region60
        $region59: #{t5_encoder_classifier_forward.1} parent=31 // pred_region
          %p426 = scmp.lt.s32.totalorder %s29, 1
          %s427 = scalar_select %p426, %s29, 1
          %s428 = smul.addr %s427, 4
          %s429 = smul.addr %s428, 8
          %s430 = scalar_lea.vmem %s7, %s429
        $region60: #{t5_encoder_classifier_forward.1} parent=31 // pred_fallthru
          _
        // Predicated region
        $region61: #{t5_encoder_classifier_forward.1} parent=31 // pred_check
          %p431 = pneg %p256
        $region62: #{t5_encoder_classifier_forward.1} parent=31 // pred_check_branch
          %433 = sbr.rel (%p431) target = $region64
        $region63: #{t5_encoder_classifier_forward.1} parent=31 // pred_region
          %p434 = scmp.lt.s32.totalorder %s29, 1
          %s435 = scalar_select %p434, %s29, 1
          %s436 = smul.addr %s435, 8
          %s437 = smul.addr %s436, 8
          %s438 = scalar_lea.vmem %s8, %s437
        $region64: #{t5_encoder_classifier_forward.1} parent=31 // pred_fallthru
          _
      $region32: #{t5_encoder_classifier_forward.1} parent=5 // pred_fallthru
        _
      %p439 = scmp.le.s32.totalorder 1, %s21
      %p440 = scmp.lt.s32.totalorder %s21, 5
      %p441 = pnand %p439, %p440
      %p442 = pneg %p441
      // Predicated region
      $region65: #{t5_encoder_classifier_forward.1} parent=5 // pred_check
        _
      $region66: #{t5_encoder_classifier_forward.1} parent=5 // pred_check_branch
        %444 = sbr.rel (%p441) target = $region68
      $region67: #{t5_encoder_classifier_forward.1} parent=5 // pred_region
        %s445 = ssub.s32 %s21, 1
        %p446 = scmp.lt.s32.totalorder %s30, 1
        %s447 = scalar_select %p446, %s30, 1
        %s448 = smul.addr %s447, 8
        %s449 = scalar_lea.vmem %s0, %s448
        %p450 = pneg %p59
        %p451 = pneg %p56
        %p452 = pneg %p80
        %p453 = pneg %p77
        %p454 = scmp.lt.s32.totalorder %s30, 1
        %s455 = scalar_select %p454, %s30, 1
        %s456 = scalar_lea.vmem %s2, %s455
        %p457 = pneg %p106
        %p458 = pneg %p103
        %p459 = scmp.lt.s32.totalorder %s31, 1
        %s460 = scalar_select %p459, %s31, 1
        %s461 = scalar_lea.vmem %s3, %s460
        %p462 = pneg %p132
        %p463 = pneg %p129
        %p464 = scmp.lt.s32.totalorder %s31, 1
        %s465 = scalar_select %p464, %s31, 1
        %s466 = smul.addr %s465, 4
        %s467 = smul.addr %s466, 8
        %s468 = scalar_lea.vmem %s4, %s467
        %p469 = pneg %p158
        %p470 = pneg %p155
        %p471 = scmp.lt.s32.totalorder %s31, 1
        %s472 = scalar_select %p471, %s31, 1
        %s473 = smul.addr %s472, 4
        %s474 = smul.addr %s473, 8
        %s475 = scalar_lea.vmem %s5, %s474
        %p476 = pneg %p184
        %p477 = pneg %p181
        %p478 = scmp.lt.s32.totalorder %s31, 1
        %s479 = scalar_select %p478, %s31, 1
        %s480 = scalar_lea.vmem %s6, %s479
        %p481 = pneg %p210
        %p482 = pneg %p207
        %p483 = scmp.lt.s32.totalorder %s31, 1
        %s484 = scalar_select %p483, %s31, 1
        %s485 = smul.addr %s484, 4
        %s486 = smul.addr %s485, 8
        %s487 = scalar_lea.vmem %s7, %s486
        %p488 = pneg %p236
        %p489 = pneg %p233
        %p490 = scmp.lt.s32.totalorder %s31, 1
        %s491 = scalar_select %p490, %s31, 1
        %s492 = smul.addr %s491, 8
        %s493 = smul.addr %s492, 8
        %s494 = scalar_lea.vmem %s8, %s493
        %p495 = pneg %p262
        %p496 = pneg %p259
        %p497 = pneg %p283
        %p498 = pneg %p280
        %p499 = pneg %p304
        %p500 = pneg %p301
        %p501 = pneg %p325
        %p502 = pneg %p322
        %p503 = pneg %p351
        %p504 = pneg %p348
        %s505 = sand.u32 %s338, 1
        %s506 = scalar_lea.sflag [#allocation4], %s505
        %s507 = sand.u32 %s338, 1
        %s508 = scalar_lea.vmem [#allocation3], %s507
        %p509 = scmp.lt.s32.totalorder %s30, 1
        %s510 = scalar_select %p509, %s30, 1
        %s511 = smul.addr %s510, 8
        %s512 = scalar_lea.vmem %s0, %s511
        %p513 = scmp.lt.s32.totalorder %s30, 1
        %s514 = scalar_select %p513, %s30, 1
        %s515 = scalar_lea.vmem %s2, %s514
        %p516 = scmp.lt.s32.totalorder %s31, 1
        %s517 = scalar_select %p516, %s31, 1
        %s518 = scalar_lea.vmem %s3, %s517
        %p519 = scmp.lt.s32.totalorder %s31, 1
        %s520 = scalar_select %p519, %s31, 1
        %s521 = smul.addr %s520, 4
        %s522 = smul.addr %s521, 8
        %s523 = scalar_lea.vmem %s4, %s522
        %p524 = scmp.lt.s32.totalorder %s31, 1
        %s525 = scalar_select %p524, %s31, 1
        %s526 = smul.addr %s525, 4
        %s527 = smul.addr %s526, 8
        %s528 = scalar_lea.vmem %s5, %s527
        %p529 = scmp.lt.s32.totalorder %s31, 1
        %s530 = scalar_select %p529, %s31, 1
        %s531 = scalar_lea.vmem %s6, %s530
        %p532 = scmp.lt.s32.totalorder %s31, 1
        %s533 = scalar_select %p532, %s31, 1
        %s534 = smul.addr %s533, 4
        %s535 = smul.addr %s534, 8
        %s536 = scalar_lea.vmem %s7, %s535
        %p537 = scmp.lt.s32.totalorder %s31, 1
        %s538 = scalar_select %p537, %s31, 1
        %s539 = smul.addr %s538, 8
        %s540 = smul.addr %s539, 8
        %s541 = scalar_lea.vmem %s8, %s540
        %p542 = scmp.eq.s32.totalorder %s31, 0
        // Predicated region
        $region69: #{t5_encoder_classifier_forward.1} parent=67 // pred_check
          %p543 = pneg %p542
        $region70: #{t5_encoder_classifier_forward.1} parent=67 // pred_check_branch
          %545 = sbr.rel (%p543) target = $region72
        $region71: #{t5_encoder_classifier_forward.1} parent=67 // pred_region
          %v546 = vld [vmem:[%s512] sm:$0xff]
          %vm547 = vcmask 261120
          %548 = vst.msk [vmem:[#allocation2] sm:$0xff] %vm547, %v546
        $region72: #{t5_encoder_classifier_forward.1} parent=67 // pred_fallthru
          _
        %v549 = vld [vmem:[#allocation2] sm:$0xff]
        %v550 = vld [vmem:[%s1] sm:$0xff]
        %v551 = vld [vmem:[%s1 + $0x8] sm:$0xff]
        %v552 = vld [vmem:[%s1 + $0x10] sm:$0xff]
        %v553 = vld [vmem:[%s1 + $0x18] sm:$0xff]
        %v554 = vld [vmem:[%s515] sm:$0x1]
        %v555 = vmul.f32 %v549, %v549
        %vm556 = vcmask 261120
        %v557 = vsel %vm556, %v555, 0.0
        %558 = vadd.xlane.f32.xlu0 %v557
        %v559 = vpop.xlane.xlu0 %558
        %v560 = vrcp.pop 32.0
        %v561 = vmul.f32 %v559, %v560
        %v562 = vadd.f32 %v561, 1e-06
        %v563 = vrsqrt.pop %v562
        %v564 = vmul.f32 %v549, %v563
        %v565 = vld [vmem:[%s518] sm:$0x1]
        %v567 = vlaneseq
        %v568 = vshrl.u32 %v567, 7
        %v569 = vsub.s32 0, %v568
        %v570 = vrot.slane %v565, %v569
        %v572 = vmul.f32 %v564, %v570
        %v573 = vld [vmem:[%s523] sm:$0xff]
        %v574 = vld [vmem:[%s523 + $0x8] sm:$0xff]
        %v575 = vld [vmem:[%s523 + $0x10] sm:$0xff]
        %v576 = vld [vmem:[%s523 + $0x18] sm:$0xff]
        %v578 = vsel %vm556, %v572, 0
        %580 = vmatprep.subr.mxu0 0.0
        %581 = vmatpush1.msra.mxu0 0.0
        %582 = vmatprep.subr.mxu0 0.0
        %583 = vmatpush1.msra.mxu0 0.0
        %584 = vmatprep.subr.mxu0 0.0
        %585 = vmatpush1.msra.mxu0 0.0
        %586 = vmatprep.subr.mxu0 0.0
        %587 = vmatpush1.msra.mxu0 0.0
        %588 = vmatprep.subr.mxu0 0.0
        %589 = vmatpush1.msra.mxu0 0.0
        %590 = vmatprep.subr.mxu0 0.0
        %591 = vmatpush1.msra.mxu0 0.0
        %592 = vmatprep.subr.mxu0 0.0
        %593 = vmatpush1.msra.mxu0 0.0
        %594 = vmatprep.subr.mxu0 0.0
        %595 = vmatpush1.msra.mxu0 0.0
        %596 = vmatprep.subr.mxu0 0.0
        %597 = vmatpush1.msra.mxu0 0.0
        %598 = vmatprep.subr.mxu0 0.0
        %599 = vmatpush1.msra.mxu0 0.0
        %600 = vmatprep.subr.mxu0 0.0
        %601 = vmatpush1.msra.mxu0 0.0
        %602 = vmatprep.subr.mxu0 0.0
        %603 = vmatpush1.msra.mxu0 0.0
        %604 = vmatprep.subr.mxu0 0.0
        %605 = vmatpush1.msra.mxu0 %v576
        %606 = vmatprep.subr.mxu0 0.0
        %607 = vmatpush1.msra.mxu0 %v575
        %608 = vmatprep.subr.mxu0 0.0
        %609 = vmatpush1.msra.mxu0 %v574
        %610 = vmatprep.subr.mxu0 0.0
        %611 = vmatpush1.msra.mxu0 %v573
        %612 = vmatprep.subr.mxu0 0.0
        %613 = vmatpush2.msra.mxu0 0.0
        %614 = vmatprep.subr.mxu0 0.0
        %615 = vmatpush2.msra.mxu0 0.0
        %616 = vmatprep.subr.mxu0 0.0
        %617 = vmatpush2.msra.mxu0 0.0
        %618 = vmatprep.subr.mxu0 0.0
        %619 = vmatpush2.msra.mxu0 0.0
        %620 = vmatprep.subr.mxu0 0.0
        %621 = vmatpush2.msra.mxu0 0.0
        %622 = vmatprep.subr.mxu0 0.0
        %623 = vmatpush2.msra.mxu0 0.0
        %624 = vmatprep.subr.mxu0 0.0
        %625 = vmatpush2.msra.mxu0 0.0
        %626 = vmatprep.subr.mxu0 0.0
        %627 = vmatpush2.msra.mxu0 0.0
        %628 = vmatprep.subr.mxu0 0.0
        %629 = vmatpush2.msra.mxu0 0.0
        %630 = vmatprep.subr.mxu0 0.0
        %631 = vmatpush2.msra.mxu0 0.0
        %632 = vmatprep.subr.mxu0 0.0
        %633 = vmatpush2.msra.mxu0 0.0
        %634 = vmatprep.subr.mxu0 0.0
        %635 = vmatpush2.msra.mxu0 0.0
        %636 = vmatprep.subr.mxu0 0.0
        %637 = vmatpush2.msra.mxu0 0.0
        %638 = vmatprep.subr.mxu0 0.0
        %639 = vmatpush2.msra.mxu0 0.0
        %640 = vmatprep.subr.mxu0 0.0
        %641 = vmatpush2.msra.mxu0 0.0
        %642 = vmatprep.subr.mxu0 0.0
        %643 = vmatpush2.msra.mxu0 0.0
        %644 = vmatprep.mubr.f32.mxu0 0.0
        %645 = vmatmul.mubr.f32.gmra.mxu0 %v578
        %v646 = vpop.f32.mrf.mxu0
        %v647 = vadd.f32 0.0, %v646
        %v648 = vpop.f32.mrf.mxu0
        %649 = vdwg.mxu0
        %651 = vrot.lane.b32.xlu0 %v647, 120
        %v652 = vpop.permute.xlu0 %651
        %653 = vrot.lane.b32.xlu0 %v647, 112
        %v654 = vpop.permute.xlu0 %653
        %655 = vrot.lane.b32.xlu0 %v647, 104
        %v656 = vpop.permute.xlu0 %655
        %657 = vrot.lane.b32.xlu0 %v647, 96
        %v658 = vpop.permute.xlu0 %657
        %vm659 = vcmask 64512
        %v660 = vsel %vm659, %v647, 0
        %v662 = vsel %vm659, %v658, 0
        %664 = vmatprep.subr.mxu0 0.0
        %665 = vmatpush1.xpose.msra.mxu0 0.0
        %666 = vmatprep.subr.mxu0 0.0
        %667 = vmatpush1.xpose.msra.mxu0 0.0
        %668 = vmatprep.subr.mxu0 0.0
        %669 = vmatpush1.xpose.msra.mxu0 0.0
        %670 = vmatprep.subr.mxu0 0.0
        %671 = vmatpush1.xpose.msra.mxu0 0.0
        %672 = vmatprep.subr.mxu0 0.0
        %673 = vmatpush1.xpose.msra.mxu0 0.0
        %674 = vmatprep.subr.mxu0 0.0
        %675 = vmatpush1.xpose.msra.mxu0 0.0
        %676 = vmatprep.subr.mxu0 0.0
        %677 = vmatpush1.xpose.msra.mxu0 0.0
        %678 = vmatprep.subr.mxu0 0.0
        %679 = vmatpush1.xpose.msra.mxu0 0.0
        %680 = vmatprep.subr.mxu0 0.0
        %681 = vmatpush1.xpose.msra.mxu0 0.0
        %682 = vmatprep.subr.mxu0 0.0
        %683 = vmatpush1.xpose.msra.mxu0 0.0
        %684 = vmatprep.subr.mxu0 0.0
        %685 = vmatpush1.xpose.msra.mxu0 0.0
        %686 = vmatprep.subr.mxu0 0.0
        %687 = vmatpush1.xpose.msra.mxu0 0.0
        %688 = vmatprep.subr.mxu0 0.0
        %689 = vmatpush1.xpose.msra.mxu0 0.0
        %690 = vmatprep.subr.mxu0 0.0
        %691 = vmatpush1.xpose.msra.mxu0 0.0
        %692 = vmatprep.subr.mxu0 0.0
        %693 = vmatpush1.xpose.msra.mxu0 0.0
        %694 = vmatprep.subr.mxu0 0.0
        %695 = vmatpush1.xpose.msra.mxu0 %v662
        %696 = vmatprep.subr.mxu0 0.0
        %697 = vmatpush2.xpose.msra.mxu0 0.0
        %698 = vmatprep.subr.mxu0 0.0
        %699 = vmatpush2.xpose.msra.mxu0 0.0
        %700 = vmatprep.subr.mxu0 0.0
        %701 = vmatpush2.xpose.msra.mxu0 0.0
        %702 = vmatprep.subr.mxu0 0.0
        %703 = vmatpush2.xpose.msra.mxu0 0.0
        %704 = vmatprep.subr.mxu0 0.0
        %705 = vmatpush2.xpose.msra.mxu0 0.0
        %706 = vmatprep.subr.mxu0 0.0
        %707 = vmatpush2.xpose.msra.mxu0 0.0
        %708 = vmatprep.subr.mxu0 0.0
        %709 = vmatpush2.xpose.msra.mxu0 0.0
        %710 = vmatprep.subr.mxu0 0.0
        %711 = vmatpush2.xpose.msra.mxu0 0.0
        %712 = vmatprep.subr.mxu0 0.0
        %713 = vmatpush2.xpose.msra.mxu0 0.0
        %714 = vmatprep.subr.mxu0 0.0
        %715 = vmatpush2.xpose.msra.mxu0 0.0
        %716 = vmatprep.subr.mxu0 0.0
        %717 = vmatpush2.xpose.msra.mxu0 0.0
        %718 = vmatprep.subr.mxu0 0.0
        %719 = vmatpush2.xpose.msra.mxu0 0.0
        %720 = vmatprep.subr.mxu0 0.0
        %721 = vmatpush2.xpose.msra.mxu0 0.0
        %722 = vmatprep.subr.mxu0 0.0
        %723 = vmatpush2.xpose.msra.mxu0 0.0
        %724 = vmatprep.subr.mxu0 0.0
        %725 = vmatpush2.xpose.msra.mxu0 0.0
        %726 = vmatprep.subr.mxu0 0.0
        %727 = vmatpush2.xpose.msra.mxu0 0.0
        %728 = vmatprep.mubr.f32.mxu0 0.0
        %729 = vmatmul.mubr.f32.gmra.mxu0 %v660
        %v730 = vpop.f32.mrf.mxu0
        %v731 = vadd.f32 %v550, %v730
        %v732 = vpop.f32.mrf.mxu0
        %733 = vdwg.mxu0
        %734 = vrot.lane.b32.xlu0 %v652, 96
        %v735 = vpop.permute.xlu0 %734
        %v736 = vsel %vm659, %v652, 0
        %v738 = vsel %vm659, %v735, 0
        %740 = vmatprep.subr.mxu0 0.0
        %741 = vmatpush1.xpose.msra.mxu0 0.0
        %742 = vmatprep.subr.mxu0 0.0
        %743 = vmatpush1.xpose.msra.mxu0 0.0
        %744 = vmatprep.subr.mxu0 0.0
        %745 = vmatpush1.xpose.msra.mxu0 0.0
        %746 = vmatprep.subr.mxu0 0.0
        %747 = vmatpush1.xpose.msra.mxu0 0.0
        %748 = vmatprep.subr.mxu0 0.0
        %749 = vmatpush1.xpose.msra.mxu0 0.0
        %750 = vmatprep.subr.mxu0 0.0
        %751 = vmatpush1.xpose.msra.mxu0 0.0
        %752 = vmatprep.subr.mxu0 0.0
        %753 = vmatpush1.xpose.msra.mxu0 0.0
        %754 = vmatprep.subr.mxu0 0.0
        %755 = vmatpush1.xpose.msra.mxu0 0.0
        %756 = vmatprep.subr.mxu0 0.0
        %757 = vmatpush1.xpose.msra.mxu0 0.0
        %758 = vmatprep.subr.mxu0 0.0
        %759 = vmatpush1.xpose.msra.mxu0 0.0
        %760 = vmatprep.subr.mxu0 0.0
        %761 = vmatpush1.xpose.msra.mxu0 0.0
        %762 = vmatprep.subr.mxu0 0.0
        %763 = vmatpush1.xpose.msra.mxu0 0.0
        %764 = vmatprep.subr.mxu0 0.0
        %765 = vmatpush1.xpose.msra.mxu0 0.0
        %766 = vmatprep.subr.mxu0 0.0
        %767 = vmatpush1.xpose.msra.mxu0 0.0
        %768 = vmatprep.subr.mxu0 0.0
        %769 = vmatpush1.xpose.msra.mxu0 0.0
        %770 = vmatprep.subr.mxu0 0.0
        %771 = vmatpush1.xpose.msra.mxu0 %v738
        %772 = vmatprep.subr.mxu0 0.0
        %773 = vmatpush2.xpose.msra.mxu0 0.0
        %774 = vmatprep.subr.mxu0 0.0
        %775 = vmatpush2.xpose.msra.mxu0 0.0
        %776 = vmatprep.subr.mxu0 0.0
        %777 = vmatpush2.xpose.msra.mxu0 0.0
        %778 = vmatprep.subr.mxu0 0.0
        %779 = vmatpush2.xpose.msra.mxu0 0.0
        %780 = vmatprep.subr.mxu0 0.0
        %781 = vmatpush2.xpose.msra.mxu0 0.0
        %782 = vmatprep.subr.mxu0 0.0
        %783 = vmatpush2.xpose.msra.mxu0 0.0
        %784 = vmatprep.subr.mxu0 0.0
        %785 = vmatpush2.xpose.msra.mxu0 0.0
        %786 = vmatprep.subr.mxu0 0.0
        %787 = vmatpush2.xpose.msra.mxu0 0.0
        %788 = vmatprep.subr.mxu0 0.0
        %789 = vmatpush2.xpose.msra.mxu0 0.0
        %790 = vmatprep.subr.mxu0 0.0
        %791 = vmatpush2.xpose.msra.mxu0 0.0
        %792 = vmatprep.subr.mxu0 0.0
        %793 = vmatpush2.xpose.msra.mxu0 0.0
        %794 = vmatprep.subr.mxu0 0.0
        %795 = vmatpush2.xpose.msra.mxu0 0.0
        %796 = vmatprep.subr.mxu0 0.0
        %797 = vmatpush2.xpose.msra.mxu0 0.0
        %798 = vmatprep.subr.mxu0 0.0
        %799 = vmatpush2.xpose.msra.mxu0 0.0
        %800 = vmatprep.subr.mxu0 0.0
        %801 = vmatpush2.xpose.msra.mxu0 0.0
        %802 = vmatprep.subr.mxu0 0.0
        %803 = vmatpush2.xpose.msra.mxu0 0.0
        %804 = vmatprep.mubr.f32.mxu0 0.0
        %805 = vmatmul.mubr.f32.gmra.mxu0 %v736
        %v806 = vpop.f32.mrf.mxu0
        %v807 = vadd.f32 %v551, %v806
        %v808 = vpop.f32.mrf.mxu0
        %809 = vdwg.mxu0
        %810 = vrot.lane.b32.xlu0 %v654, 96
        %v811 = vpop.permute.xlu0 %810
        %v812 = vsel %vm659, %v654, 0
        %v814 = vsel %vm659, %v811, 0
        %816 = vmatprep.subr.mxu0 0.0
        %817 = vmatpush1.xpose.msra.mxu0 0.0
        %818 = vmatprep.subr.mxu0 0.0
        %819 = vmatpush1.xpose.msra.mxu0 0.0
        %820 = vmatprep.subr.mxu0 0.0
        %821 = vmatpush1.xpose.msra.mxu0 0.0
        %822 = vmatprep.subr.mxu0 0.0
        %823 = vmatpush1.xpose.msra.mxu0 0.0
        %824 = vmatprep.subr.mxu0 0.0
        %825 = vmatpush1.xpose.msra.mxu0 0.0
        %826 = vmatprep.subr.mxu0 0.0
        %827 = vmatpush1.xpose.msra.mxu0 0.0
        %828 = vmatprep.subr.mxu0 0.0
        %829 = vmatpush1.xpose.msra.mxu0 0.0
        %830 = vmatprep.subr.mxu0 0.0
        %831 = vmatpush1.xpose.msra.mxu0 0.0
        %832 = vmatprep.subr.mxu0 0.0
        %833 = vmatpush1.xpose.msra.mxu0 0.0
        %834 = vmatprep.subr.mxu0 0.0
        %835 = vmatpush1.xpose.msra.mxu0 0.0
        %836 = vmatprep.subr.mxu0 0.0
        %837 = vmatpush1.xpose.msra.mxu0 0.0
        %838 = vmatprep.subr.mxu0 0.0
        %839 = vmatpush1.xpose.msra.mxu0 0.0
        %840 = vmatprep.subr.mxu0 0.0
        %841 = vmatpush1.xpose.msra.mxu0 0.0
        %842 = vmatprep.subr.mxu0 0.0
        %843 = vmatpush1.xpose.msra.mxu0 0.0
        %844 = vmatprep.subr.mxu0 0.0
        %845 = vmatpush1.xpose.msra.mxu0 0.0
        %846 = vmatprep.subr.mxu0 0.0
        %847 = vmatpush1.xpose.msra.mxu0 %v814
        %848 = vmatprep.subr.mxu0 0.0
        %849 = vmatpush2.xpose.msra.mxu0 0.0
        %850 = vmatprep.subr.mxu0 0.0
        %851 = vmatpush2.xpose.msra.mxu0 0.0
        %852 = vmatprep.subr.mxu0 0.0
        %853 = vmatpush2.xpose.msra.mxu0 0.0
        %854 = vmatprep.subr.mxu0 0.0
        %855 = vmatpush2.xpose.msra.mxu0 0.0
        %856 = vmatprep.subr.mxu0 0.0
        %857 = vmatpush2.xpose.msra.mxu0 0.0
        %858 = vmatprep.subr.mxu0 0.0
        %859 = vmatpush2.xpose.msra.mxu0 0.0
        %860 = vmatprep.subr.mxu0 0.0
        %861 = vmatpush2.xpose.msra.mxu0 0.0
        %862 = vmatprep.subr.mxu0 0.0
        %863 = vmatpush2.xpose.msra.mxu0 0.0
        %864 = vmatprep.subr.mxu0 0.0
        %865 = vmatpush2.xpose.msra.mxu0 0.0
        %866 = vmatprep.subr.mxu0 0.0
        %867 = vmatpush2.xpose.msra.mxu0 0.0
        %868 = vmatprep.subr.mxu0 0.0
        %869 = vmatpush2.xpose.msra.mxu0 0.0
        %870 = vmatprep.subr.mxu0 0.0
        %871 = vmatpush2.xpose.msra.mxu0 0.0
        %872 = vmatprep.subr.mxu0 0.0
        %873 = vmatpush2.xpose.msra.mxu0 0.0
        %874 = vmatprep.subr.mxu0 0.0
        %875 = vmatpush2.xpose.msra.mxu0 0.0
        %876 = vmatprep.subr.mxu0 0.0
        %877 = vmatpush2.xpose.msra.mxu0 0.0
        %878 = vmatprep.subr.mxu0 0.0
        %879 = vmatpush2.xpose.msra.mxu0 0.0
        %880 = vmatprep.mubr.f32.mxu0 0.0
        %881 = vmatmul.mubr.f32.gmra.mxu0 %v812
        %v882 = vpop.f32.mrf.mxu0
        %v883 = vadd.f32 %v552, %v882
        %v884 = vpop.f32.mrf.mxu0
        %885 = vdwg.mxu0
        %886 = vrot.lane.b32.xlu0 %v656, 96
        %v887 = vpop.permute.xlu0 %886
        %v888 = vsel %vm659, %v656, 0
        %v890 = vsel %vm659, %v887, 0
        %892 = vmatprep.subr.mxu0 0.0
        %893 = vmatpush1.xpose.msra.mxu0 0.0
        %894 = vmatprep.subr.mxu0 0.0
        %895 = vmatpush1.xpose.msra.mxu0 0.0
        %896 = vmatprep.subr.mxu0 0.0
        %897 = vmatpush1.xpose.msra.mxu0 0.0
        %898 = vmatprep.subr.mxu0 0.0
        %899 = vmatpush1.xpose.msra.mxu0 0.0
        %900 = vmatprep.subr.mxu0 0.0
        %901 = vmatpush1.xpose.msra.mxu0 0.0
        %902 = vmatprep.subr.mxu0 0.0
        %903 = vmatpush1.xpose.msra.mxu0 0.0
        %904 = vmatprep.subr.mxu0 0.0
        %905 = vmatpush1.xpose.msra.mxu0 0.0
        %906 = vmatprep.subr.mxu0 0.0
        %907 = vmatpush1.xpose.msra.mxu0 0.0
        %908 = vmatprep.subr.mxu0 0.0
        %909 = vmatpush1.xpose.msra.mxu0 0.0
        %910 = vmatprep.subr.mxu0 0.0
        %911 = vmatpush1.xpose.msra.mxu0 0.0
        %912 = vmatprep.subr.mxu0 0.0
        %913 = vmatpush1.xpose.msra.mxu0 0.0
        %914 = vmatprep.subr.mxu0 0.0
        %915 = vmatpush1.xpose.msra.mxu0 0.0
        %916 = vmatprep.subr.mxu0 0.0
        %917 = vmatpush1.xpose.msra.mxu0 0.0
        %918 = vmatprep.subr.mxu0 0.0
        %919 = vmatpush1.xpose.msra.mxu0 0.0
        %920 = vmatprep.subr.mxu0 0.0
        %921 = vmatpush1.xpose.msra.mxu0 0.0
        %922 = vmatprep.subr.mxu0 0.0
        %923 = vmatpush1.xpose.msra.mxu0 %v890
        %924 = vmatprep.subr.mxu0 0.0
        %925 = vmatpush2.xpose.msra.mxu0 0.0
        %926 = vmatprep.subr.mxu0 0.0
        %927 = vmatpush2.xpose.msra.mxu0 0.0
        %928 = vmatprep.subr.mxu0 0.0
        %929 = vmatpush2.xpose.msra.mxu0 0.0
        %930 = vmatprep.subr.mxu0 0.0
        %931 = vmatpush2.xpose.msra.mxu0 0.0
        %932 = vmatprep.subr.mxu0 0.0
        %933 = vmatpush2.xpose.msra.mxu0 0.0
        %934 = vmatprep.subr.mxu0 0.0
        %935 = vmatpush2.xpose.msra.mxu0 0.0
        %936 = vmatprep.subr.mxu0 0.0
        %937 = vmatpush2.xpose.msra.mxu0 0.0
        %938 = vmatprep.subr.mxu0 0.0
        %939 = vmatpush2.xpose.msra.mxu0 0.0
        %940 = vmatprep.subr.mxu0 0.0
        %941 = vmatpush2.xpose.msra.mxu0 0.0
        %942 = vmatprep.subr.mxu0 0.0
        %943 = vmatpush2.xpose.msra.mxu0 0.0
        %944 = vmatprep.subr.mxu0 0.0
        %945 = vmatpush2.xpose.msra.mxu0 0.0
        %946 = vmatprep.subr.mxu0 0.0
        %947 = vmatpush2.xpose.msra.mxu0 0.0
        %948 = vmatprep.subr.mxu0 0.0
        %949 = vmatpush2.xpose.msra.mxu0 0.0
        %950 = vmatprep.subr.mxu0 0.0
        %951 = vmatpush2.xpose.msra.mxu0 0.0
        %952 = vmatprep.subr.mxu0 0.0
        %953 = vmatpush2.xpose.msra.mxu0 0.0
        %954 = vmatprep.subr.mxu0 0.0
        %955 = vmatpush2.xpose.msra.mxu0 0.0
        %956 = vmatprep.mubr.f32.mxu0 0.0
        %957 = vmatmul.mubr.f32.gmra.mxu0 %v888
        %v958 = vpop.f32.mrf.mxu0
        %v959 = vadd.f32 %v553, %v958
        %v960 = vpop.f32.mrf.mxu0
        %961 = vdwg.mxu0
        %v963 = vlaneseq
        %v964 = vshrl.u32 %v963, 7
        %v965 = vsub.s32 0, %v964
        %v966 = vrot.slane %v554, %v965
        %v968 = vadd.f32 %v731, %v966
        %v969 = vadd.f32 %v807, %v966
        %v970 = vadd.f32 %v883, %v966
        %v971 = vadd.f32 %v959, %v966
        %v972 = vsel %vm659, %v968, -inf
        %973 = vmax.xlane.f32.xlu0 %v972
        %v974 = vpop.xlane.xlu0 %973
        %v975 = vsel %vm659, %v969, -inf
        %976 = vmax.xlane.f32.xlu0 %v975
        %v977 = vpop.xlane.xlu0 %976
        %v978 = vsel %vm659, %v970, -inf
        %979 = vmax.xlane.f32.xlu0 %v978
        %v980 = vpop.xlane.xlu0 %979
        %v981 = vsel %vm659, %v971, -inf
        %982 = vmax.xlane.f32.xlu0 %v981
        %v983 = vpop.xlane.xlu0 %982
        %v984 = vsub.f32 %v968, %v974
        %v985 = vsub.f32 %v969, %v977
        %v986 = vsub.f32 %v970, %v980
        %v987 = vsub.f32 %v971, %v983
        %v988 = vmul.f32 %v984, 1.442695
        %v989 = vpow.pop %v988
        %v990 = vmul.f32 %v985, 1.442695
        %v991 = vpow.pop %v990
        %v992 = vmul.f32 %v986, 1.442695
        %v993 = vpow.pop %v992
        %v994 = vmul.f32 %v987, 1.442695
        %v995 = vpow.pop %v994
        %v996 = vsel %vm659, %v989, 0.0
        %997 = vadd.xlane.f32.xlu0 %v996
        %v998 = vpop.xlane.xlu0 %997
        %v999 = vsel %vm659, %v991, 0.0
        %1000 = vadd.xlane.f32.xlu0 %v999
        %v1001 = vpop.xlane.xlu0 %1000
        %v1002 = vsel %vm659, %v993, 0.0
        %1003 = vadd.xlane.f32.xlu0 %v1002
        %v1004 = vpop.xlane.xlu0 %1003
        %v1005 = vsel %vm659, %v995, 0.0
        %1006 = vadd.xlane.f32.xlu0 %v1005
        %v1007 = vpop.xlane.xlu0 %1006
        %v1008 = vrcp.pop %v998
        %v1009 = vrcp.pop %v1001
        %v1010 = vrcp.pop %v1004
        %v1011 = vrcp.pop %v1007
        %v1012 = vmul.f32 %v989, %v1008
        %v1013 = vmul.f32 %v991, %v1009
        %v1014 = vmul.f32 %v993, %v1010
        %v1015 = vmul.f32 %v995, %v1011
        %1016 = vrot.lane.b32.xlu0 %v647, 64
        %v1017 = vpop.permute.xlu0 %1016
        %v1020 = vsel %vm659, %v1012, 0
        %1022 = vmatprep.subr.mxu0 0.0
        %1023 = vmatpush1.msra.mxu0 0.0
        %1024 = vmatprep.subr.mxu0 0.0
        %1025 = vmatpush1.msra.mxu0 0.0
        %1026 = vmatprep.subr.mxu0 0.0
        %1027 = vmatpush1.msra.mxu0 0.0
        %1028 = vmatprep.subr.mxu0 0.0
        %1029 = vmatpush1.msra.mxu0 0.0
        %1030 = vmatprep.subr.mxu0 0.0
        %1031 = vmatpush1.msra.mxu0 0.0
        %1032 = vmatprep.subr.mxu0 0.0
        %1033 = vmatpush1.msra.mxu0 0.0
        %1034 = vmatprep.subr.mxu0 0.0
        %1035 = vmatpush1.msra.mxu0 0.0
        %1036 = vmatprep.subr.mxu0 0.0
        %1037 = vmatpush1.msra.mxu0 0.0
        %1038 = vmatprep.subr.mxu0 0.0
        %1039 = vmatpush1.msra.mxu0 0.0
        %1040 = vmatprep.subr.mxu0 0.0
        %1041 = vmatpush1.msra.mxu0 0.0
        %1042 = vmatprep.subr.mxu0 0.0
        %1043 = vmatpush1.msra.mxu0 0.0
        %1044 = vmatprep.subr.mxu0 0.0
        %1045 = vmatpush1.msra.mxu0 0.0
        %1046 = vmatprep.subr.mxu0 0.0
        %1047 = vmatpush1.msra.mxu0 0.0
        %1048 = vmatprep.subr.mxu0 0.0
        %1049 = vmatpush1.msra.mxu0 0.0
        %1050 = vmatprep.subr.mxu0 0.0
        %1051 = vmatpush1.msra.mxu0 0.0
        %1052 = vmatprep.subr.mxu0 0.0
        %1053 = vmatpush1.msra.mxu0 %v1017
        %1054 = vmatprep.subr.mxu0 0.0
        %1055 = vmatpush2.msra.mxu0 0.0
        %1056 = vmatprep.subr.mxu0 0.0
        %1057 = vmatpush2.msra.mxu0 0.0
        %1058 = vmatprep.subr.mxu0 0.0
        %1059 = vmatpush2.msra.mxu0 0.0
        %1060 = vmatprep.subr.mxu0 0.0
        %1061 = vmatpush2.msra.mxu0 0.0
        %1062 = vmatprep.subr.mxu0 0.0
        %1063 = vmatpush2.msra.mxu0 0.0
        %1064 = vmatprep.subr.mxu0 0.0
        %1065 = vmatpush2.msra.mxu0 0.0
        %1066 = vmatprep.subr.mxu0 0.0
        %1067 = vmatpush2.msra.mxu0 0.0
        %1068 = vmatprep.subr.mxu0 0.0
        %1069 = vmatpush2.msra.mxu0 0.0
        %1070 = vmatprep.subr.mxu0 0.0
        %1071 = vmatpush2.msra.mxu0 0.0
        %1072 = vmatprep.subr.mxu0 0.0
        %1073 = vmatpush2.msra.mxu0 0.0
        %1074 = vmatprep.subr.mxu0 0.0
        %1075 = vmatpush2.msra.mxu0 0.0
        %1076 = vmatprep.subr.mxu0 0.0
        %1077 = vmatpush2.msra.mxu0 0.0
        %1078 = vmatprep.subr.mxu0 0.0
        %1079 = vmatpush2.msra.mxu0 0.0
        %1080 = vmatprep.subr.mxu0 0.0
        %1081 = vmatpush2.msra.mxu0 0.0
        %1082 = vmatprep.subr.mxu0 0.0
        %1083 = vmatpush2.msra.mxu0 0.0
        %1084 = vmatprep.subr.mxu0 0.0
        %1085 = vmatpush2.msra.mxu0 0.0
        %1086 = vmatprep.mubr.f32.mxu0 0.0
        %1087 = vmatmul.mubr.f32.gmra.mxu0 %v1020
        %v1088 = vpop.f32.mrf.mxu0
        %v1089 = vadd.f32 0.0, %v1088
        %v1090 = vpop.f32.mrf.mxu0
        %1091 = vdwg.mxu0
        %1092 = vrot.lane.b32.xlu0 %v652, 64
        %v1093 = vpop.permute.xlu0 %1092
        %v1096 = vsel %vm659, %v1013, 0
        %1098 = vmatprep.subr.mxu0 0.0
        %1099 = vmatpush1.msra.mxu0 0.0
        %1100 = vmatprep.subr.mxu0 0.0
        %1101 = vmatpush1.msra.mxu0 0.0
        %1102 = vmatprep.subr.mxu0 0.0
        %1103 = vmatpush1.msra.mxu0 0.0
        %1104 = vmatprep.subr.mxu0 0.0
        %1105 = vmatpush1.msra.mxu0 0.0
        %1106 = vmatprep.subr.mxu0 0.0
        %1107 = vmatpush1.msra.mxu0 0.0
        %1108 = vmatprep.subr.mxu0 0.0
        %1109 = vmatpush1.msra.mxu0 0.0
        %1110 = vmatprep.subr.mxu0 0.0
        %1111 = vmatpush1.msra.mxu0 0.0
        %1112 = vmatprep.subr.mxu0 0.0
        %1113 = vmatpush1.msra.mxu0 0.0
        %1114 = vmatprep.subr.mxu0 0.0
        %1115 = vmatpush1.msra.mxu0 0.0
        %1116 = vmatprep.subr.mxu0 0.0
        %1117 = vmatpush1.msra.mxu0 0.0
        %1118 = vmatprep.subr.mxu0 0.0
        %1119 = vmatpush1.msra.mxu0 0.0
        %1120 = vmatprep.subr.mxu0 0.0
        %1121 = vmatpush1.msra.mxu0 0.0
        %1122 = vmatprep.subr.mxu0 0.0
        %1123 = vmatpush1.msra.mxu0 0.0
        %1124 = vmatprep.subr.mxu0 0.0
        %1125 = vmatpush1.msra.mxu0 0.0
        %1126 = vmatprep.subr.mxu0 0.0
        %1127 = vmatpush1.msra.mxu0 0.0
        %1128 = vmatprep.subr.mxu0 0.0
        %1129 = vmatpush1.msra.mxu0 %v1093
        %1130 = vmatprep.subr.mxu0 0.0
        %1131 = vmatpush2.msra.mxu0 0.0
        %1132 = vmatprep.subr.mxu0 0.0
        %1133 = vmatpush2.msra.mxu0 0.0
        %1134 = vmatprep.subr.mxu0 0.0
        %1135 = vmatpush2.msra.mxu0 0.0
        %1136 = vmatprep.subr.mxu0 0.0
        %1137 = vmatpush2.msra.mxu0 0.0
        %1138 = vmatprep.subr.mxu0 0.0
        %1139 = vmatpush2.msra.mxu0 0.0
        %1140 = vmatprep.subr.mxu0 0.0
        %1141 = vmatpush2.msra.mxu0 0.0
        %1142 = vmatprep.subr.mxu0 0.0
        %1143 = vmatpush2.msra.mxu0 0.0
        %1144 = vmatprep.subr.mxu0 0.0
        %1145 = vmatpush2.msra.mxu0 0.0
        %1146 = vmatprep.subr.mxu0 0.0
        %1147 = vmatpush2.msra.mxu0 0.0
        %1148 = vmatprep.subr.mxu0 0.0
        %1149 = vmatpush2.msra.mxu0 0.0
        %1150 = vmatprep.subr.mxu0 0.0
        %1151 = vmatpush2.msra.mxu0 0.0
        %1152 = vmatprep.subr.mxu0 0.0
        %1153 = vmatpush2.msra.mxu0 0.0
        %1154 = vmatprep.subr.mxu0 0.0
        %1155 = vmatpush2.msra.mxu0 0.0
        %1156 = vmatprep.subr.mxu0 0.0
        %1157 = vmatpush2.msra.mxu0 0.0
        %1158 = vmatprep.subr.mxu0 0.0
        %1159 = vmatpush2.msra.mxu0 0.0
        %1160 = vmatprep.subr.mxu0 0.0
        %1161 = vmatpush2.msra.mxu0 0.0
        %1162 = vmatprep.mubr.f32.mxu0 0.0
        %1163 = vmatmul.mubr.f32.gmra.mxu0 %v1096
        %v1164 = vpop.f32.mrf.mxu0
        %v1165 = vadd.f32 0.0, %v1164
        %v1166 = vpop.f32.mrf.mxu0
        %1167 = vdwg.mxu0
        %1168 = vrot.lane.b32.xlu0 %v654, 64
        %v1169 = vpop.permute.xlu0 %1168
        %v1172 = vsel %vm659, %v1014, 0
        %1174 = vmatprep.subr.mxu0 0.0
        %1175 = vmatpush1.msra.mxu0 0.0
        %1176 = vmatprep.subr.mxu0 0.0
        %1177 = vmatpush1.msra.mxu0 0.0
        %1178 = vmatprep.subr.mxu0 0.0
        %1179 = vmatpush1.msra.mxu0 0.0
        %1180 = vmatprep.subr.mxu0 0.0
        %1181 = vmatpush1.msra.mxu0 0.0
        %1182 = vmatprep.subr.mxu0 0.0
        %1183 = vmatpush1.msra.mxu0 0.0
        %1184 = vmatprep.subr.mxu0 0.0
        %1185 = vmatpush1.msra.mxu0 0.0
        %1186 = vmatprep.subr.mxu0 0.0
        %1187 = vmatpush1.msra.mxu0 0.0
        %1188 = vmatprep.subr.mxu0 0.0
        %1189 = vmatpush1.msra.mxu0 0.0
        %1190 = vmatprep.subr.mxu0 0.0
        %1191 = vmatpush1.msra.mxu0 0.0
        %1192 = vmatprep.subr.mxu0 0.0
        %1193 = vmatpush1.msra.mxu0 0.0
        %1194 = vmatprep.subr.mxu0 0.0
        %1195 = vmatpush1.msra.mxu0 0.0
        %1196 = vmatprep.subr.mxu0 0.0
        %1197 = vmatpush1.msra.mxu0 0.0
        %1198 = vmatprep.subr.mxu0 0.0
        %1199 = vmatpush1.msra.mxu0 0.0
        %1200 = vmatprep.subr.mxu0 0.0
        %1201 = vmatpush1.msra.mxu0 0.0
        %1202 = vmatprep.subr.mxu0 0.0
        %1203 = vmatpush1.msra.mxu0 0.0
        %1204 = vmatprep.subr.mxu0 0.0
        %1205 = vmatpush1.msra.mxu0 %v1169
        %1206 = vmatprep.subr.mxu0 0.0
        %1207 = vmatpush2.msra.mxu0 0.0
        %1208 = vmatprep.subr.mxu0 0.0
        %1209 = vmatpush2.msra.mxu0 0.0
        %1210 = vmatprep.subr.mxu0 0.0
        %1211 = vmatpush2.msra.mxu0 0.0
        %1212 = vmatprep.subr.mxu0 0.0
        %1213 = vmatpush2.msra.mxu0 0.0
        %1214 = vmatprep.subr.mxu0 0.0
        %1215 = vmatpush2.msra.mxu0 0.0
        %1216 = vmatprep.subr.mxu0 0.0
        %1217 = vmatpush2.msra.mxu0 0.0
        %1218 = vmatprep.subr.mxu0 0.0
        %1219 = vmatpush2.msra.mxu0 0.0
        %1220 = vmatprep.subr.mxu0 0.0
        %1221 = vmatpush2.msra.mxu0 0.0
        %1222 = vmatprep.subr.mxu0 0.0
        %1223 = vmatpush2.msra.mxu0 0.0
        %1224 = vmatprep.subr.mxu0 0.0
        %1225 = vmatpush2.msra.mxu0 0.0
        %1226 = vmatprep.subr.mxu0 0.0
        %1227 = vmatpush2.msra.mxu0 0.0
        %1228 = vmatprep.subr.mxu0 0.0
        %1229 = vmatpush2.msra.mxu0 0.0
        %1230 = vmatprep.subr.mxu0 0.0
        %1231 = vmatpush2.msra.mxu0 0.0
        %1232 = vmatprep.subr.mxu0 0.0
        %1233 = vmatpush2.msra.mxu0 0.0
        %1234 = vmatprep.subr.mxu0 0.0
        %1235 = vmatpush2.msra.mxu0 0.0
        %1236 = vmatprep.subr.mxu0 0.0
        %1237 = vmatpush2.msra.mxu0 0.0
        %1238 = vmatprep.mubr.f32.mxu0 0.0
        %1239 = vmatmul.mubr.f32.gmra.mxu0 %v1172
        %v1240 = vpop.f32.mrf.mxu0
        %v1241 = vadd.f32 0.0, %v1240
        %v1242 = vpop.f32.mrf.mxu0
        %1243 = vdwg.mxu0
        %1244 = vrot.lane.b32.xlu0 %v656, 64
        %v1245 = vpop.permute.xlu0 %1244
        %v1248 = vsel %vm659, %v1015, 0
        %1250 = vmatprep.subr.mxu0 0.0
        %1251 = vmatpush1.msra.mxu0 0.0
        %1252 = vmatprep.subr.mxu0 0.0
        %1253 = vmatpush1.msra.mxu0 0.0
        %1254 = vmatprep.subr.mxu0 0.0
        %1255 = vmatpush1.msra.mxu0 0.0
        %1256 = vmatprep.subr.mxu0 0.0
        %1257 = vmatpush1.msra.mxu0 0.0
        %1258 = vmatprep.subr.mxu0 0.0
        %1259 = vmatpush1.msra.mxu0 0.0
        %1260 = vmatprep.subr.mxu0 0.0
        %1261 = vmatpush1.msra.mxu0 0.0
        %1262 = vmatprep.subr.mxu0 0.0
        %1263 = vmatpush1.msra.mxu0 0.0
        %1264 = vmatprep.subr.mxu0 0.0
        %1265 = vmatpush1.msra.mxu0 0.0
        %1266 = vmatprep.subr.mxu0 0.0
        %1267 = vmatpush1.msra.mxu0 0.0
        %1268 = vmatprep.subr.mxu0 0.0
        %1269 = vmatpush1.msra.mxu0 0.0
        %1270 = vmatprep.subr.mxu0 0.0
        %1271 = vmatpush1.msra.mxu0 0.0
        %1272 = vmatprep.subr.mxu0 0.0
        %1273 = vmatpush1.msra.mxu0 0.0
        %1274 = vmatprep.subr.mxu0 0.0
        %1275 = vmatpush1.msra.mxu0 0.0
        %1276 = vmatprep.subr.mxu0 0.0
        %1277 = vmatpush1.msra.mxu0 0.0
        %1278 = vmatprep.subr.mxu0 0.0
        %1279 = vmatpush1.msra.mxu0 0.0
        %1280 = vmatprep.subr.mxu0 0.0
        %1281 = vmatpush1.msra.mxu0 %v1245
        %1282 = vmatprep.subr.mxu0 0.0
        %1283 = vmatpush2.msra.mxu0 0.0
        %1284 = vmatprep.subr.mxu0 0.0
        %1285 = vmatpush2.msra.mxu0 0.0
        %1286 = vmatprep.subr.mxu0 0.0
        %1287 = vmatpush2.msra.mxu0 0.0
        %1288 = vmatprep.subr.mxu0 0.0
        %1289 = vmatpush2.msra.mxu0 0.0
        %1290 = vmatprep.subr.mxu0 0.0
        %1291 = vmatpush2.msra.mxu0 0.0
        %1292 = vmatprep.subr.mxu0 0.0
        %1293 = vmatpush2.msra.mxu0 0.0
        %1294 = vmatprep.subr.mxu0 0.0
        %1295 = vmatpush2.msra.mxu0 0.0
        %1296 = vmatprep.subr.mxu0 0.0
        %1297 = vmatpush2.msra.mxu0 0.0
        %1298 = vmatprep.subr.mxu0 0.0
        %1299 = vmatpush2.msra.mxu0 0.0
        %1300 = vmatprep.subr.mxu0 0.0
        %1301 = vmatpush2.msra.mxu0 0.0
        %1302 = vmatprep.subr.mxu0 0.0
        %1303 = vmatpush2.msra.mxu0 0.0
        %1304 = vmatprep.subr.mxu0 0.0
        %1305 = vmatpush2.msra.mxu0 0.0
        %1306 = vmatprep.subr.mxu0 0.0
        %1307 = vmatpush2.msra.mxu0 0.0
        %1308 = vmatprep.subr.mxu0 0.0
        %1309 = vmatpush2.msra.mxu0 0.0
        %1310 = vmatprep.subr.mxu0 0.0
        %1311 = vmatpush2.msra.mxu0 0.0
        %1312 = vmatprep.subr.mxu0 0.0
        %1313 = vmatpush2.msra.mxu0 0.0
        %1314 = vmatprep.mubr.f32.mxu0 0.0
        %1315 = vmatmul.mubr.f32.gmra.mxu0 %v1248
        %v1316 = vpop.f32.mrf.mxu0
        %v1317 = vadd.f32 0.0, %v1316
        %v1318 = vpop.f32.mrf.mxu0
        %1319 = vdwg.mxu0
        %1321 = vrot.lane.b32.xlu0 %v1165, 8
        %v1322 = vpop.permute.xlu0 %1321
        %1325 = vrot.lane.b32.xlu0 %v1241, 16
        %v1326 = vpop.permute.xlu0 %1325
        %1329 = vrot.lane.b32.xlu0 %v1317, 24
        %v1330 = vpop.permute.xlu0 %1329
        %v1332 = vsel %vm659, %v1089, %v1322
        %vm1333 = vcmask 130048
        %v1334 = vsel %vm1333, %v1332, %v1326
        %vm1335 = vcmask 195584
        %v1336 = vsel %vm1335, %v1334, %v1330
        %v1337 = vld [vmem:[%s528] sm:$0xff]
        %v1338 = vld [vmem:[%s528 + $0x8] sm:$0xff]
        %v1339 = vld [vmem:[%s528 + $0x10] sm:$0xff]
        %v1340 = vld [vmem:[%s528 + $0x18] sm:$0xff]
        %v1342 = vsel %vm556, %v1336, 0
        %1344 = vmatprep.subr.mxu0 0.0
        %1345 = vmatpush1.msra.mxu0 0.0
        %1346 = vmatprep.subr.mxu0 0.0
        %1347 = vmatpush1.msra.mxu0 0.0
        %1348 = vmatprep.subr.mxu0 0.0
        %1349 = vmatpush1.msra.mxu0 0.0
        %1350 = vmatprep.subr.mxu0 0.0
        %1351 = vmatpush1.msra.mxu0 0.0
        %1352 = vmatprep.subr.mxu0 0.0
        %1353 = vmatpush1.msra.mxu0 0.0
        %1354 = vmatprep.subr.mxu0 0.0
        %1355 = vmatpush1.msra.mxu0 0.0
        %1356 = vmatprep.subr.mxu0 0.0
        %1357 = vmatpush1.msra.mxu0 0.0
        %1358 = vmatprep.subr.mxu0 0.0
        %1359 = vmatpush1.msra.mxu0 0.0
        %1360 = vmatprep.subr.mxu0 0.0
        %1361 = vmatpush1.msra.mxu0 0.0
        %1362 = vmatprep.subr.mxu0 0.0
        %1363 = vmatpush1.msra.mxu0 0.0
        %1364 = vmatprep.subr.mxu0 0.0
        %1365 = vmatpush1.msra.mxu0 0.0
        %1366 = vmatprep.subr.mxu0 0.0
        %1367 = vmatpush1.msra.mxu0 0.0
        %1368 = vmatprep.subr.mxu0 0.0
        %1369 = vmatpush1.msra.mxu0 %v1340
        %1370 = vmatprep.subr.mxu0 0.0
        %1371 = vmatpush1.msra.mxu0 %v1339
        %1372 = vmatprep.subr.mxu0 0.0
        %1373 = vmatpush1.msra.mxu0 %v1338
        %1374 = vmatprep.subr.mxu0 0.0
        %1375 = vmatpush1.msra.mxu0 %v1337
        %1376 = vmatprep.subr.mxu0 0.0
        %1377 = vmatpush2.msra.mxu0 0.0
        %1378 = vmatprep.subr.mxu0 0.0
        %1379 = vmatpush2.msra.mxu0 0.0
        %1380 = vmatprep.subr.mxu0 0.0
        %1381 = vmatpush2.msra.mxu0 0.0
        %1382 = vmatprep.subr.mxu0 0.0
        %1383 = vmatpush2.msra.mxu0 0.0
        %1384 = vmatprep.subr.mxu0 0.0
        %1385 = vmatpush2.msra.mxu0 0.0
        %1386 = vmatprep.subr.mxu0 0.0
        %1387 = vmatpush2.msra.mxu0 0.0
        %1388 = vmatprep.subr.mxu0 0.0
        %1389 = vmatpush2.msra.mxu0 0.0
        %1390 = vmatprep.subr.mxu0 0.0
        %1391 = vmatpush2.msra.mxu0 0.0
        %1392 = vmatprep.subr.mxu0 0.0
        %1393 = vmatpush2.msra.mxu0 0.0
        %1394 = vmatprep.subr.mxu0 0.0
        %1395 = vmatpush2.msra.mxu0 0.0
        %1396 = vmatprep.subr.mxu0 0.0
        %1397 = vmatpush2.msra.mxu0 0.0
        %1398 = vmatprep.subr.mxu0 0.0
        %1399 = vmatpush2.msra.mxu0 0.0
        %1400 = vmatprep.subr.mxu0 0.0
        %1401 = vmatpush2.msra.mxu0 0.0
        %1402 = vmatprep.subr.mxu0 0.0
        %1403 = vmatpush2.msra.mxu0 0.0
        %1404 = vmatprep.subr.mxu0 0.0
        %1405 = vmatpush2.msra.mxu0 0.0
        %1406 = vmatprep.subr.mxu0 0.0
        %1407 = vmatpush2.msra.mxu0 0.0
        %1408 = vmatprep.mubr.f32.mxu0 0.0
        %1409 = vmatmul.mubr.f32.gmra.mxu0 %v1342
        %v1410 = vpop.f32.mrf.mxu0
        %v1411 = vadd.f32 0.0, %v1410
        %v1412 = vpop.f32.mrf.mxu0
        %1413 = vdwg.mxu0
        %v1414 = vadd.f32 %v549, %v1411
        %v1415 = vmul.f32 %v1414, %v1414
        %v1416 = vsel %vm556, %v1415, 0.0
        %1417 = vadd.xlane.f32.xlu0 %v1416
        %v1418 = vpop.xlane.xlu0 %1417
        %v1419 = vmul.f32 %v1418, %v560
        %v1420 = vadd.f32 %v1419, 1e-06
        %v1421 = vrsqrt.pop %v1420
        %v1422 = vmul.f32 %v1414, %v1421
        %v1423 = vld [vmem:[%s531] sm:$0x1]
        %v1425 = vlaneseq
        %v1426 = vshrl.u32 %v1425, 7
        %v1427 = vsub.s32 0, %v1426
        %v1428 = vrot.slane %v1423, %v1427
        %v1430 = vmul.f32 %v1422, %v1428
        %v1431 = vld [vmem:[%s536] sm:$0xff]
        %v1432 = vld [vmem:[%s536 + $0x8] sm:$0xff]
        %v1433 = vld [vmem:[%s536 + $0x10] sm:$0xff]
        %v1434 = vld [vmem:[%s536 + $0x18] sm:$0xff]
        %v1436 = vsel %vm556, %v1430, 0
        %1438 = vmatprep.subr.mxu0 0.0
        %1439 = vmatpush1.msra.mxu0 0.0
        %1440 = vmatprep.subr.mxu0 0.0
        %1441 = vmatpush1.msra.mxu0 0.0
        %1442 = vmatprep.subr.mxu0 0.0
        %1443 = vmatpush1.msra.mxu0 0.0
        %1444 = vmatprep.subr.mxu0 0.0
        %1445 = vmatpush1.msra.mxu0 0.0
        %1446 = vmatprep.subr.mxu0 0.0
        %1447 = vmatpush1.msra.mxu0 0.0
        %1448 = vmatprep.subr.mxu0 0.0
        %1449 = vmatpush1.msra.mxu0 0.0
        %1450 = vmatprep.subr.mxu0 0.0
        %1451 = vmatpush1.msra.mxu0 0.0
        %1452 = vmatprep.subr.mxu0 0.0
        %1453 = vmatpush1.msra.mxu0 0.0
        %1454 = vmatprep.subr.mxu0 0.0
        %1455 = vmatpush1.msra.mxu0 0.0
        %1456 = vmatprep.subr.mxu0 0.0
        %1457 = vmatpush1.msra.mxu0 0.0
        %1458 = vmatprep.subr.mxu0 0.0
        %1459 = vmatpush1.msra.mxu0 0.0
        %1460 = vmatprep.subr.mxu0 0.0
        %1461 = vmatpush1.msra.mxu0 0.0
        %1462 = vmatprep.subr.mxu0 0.0
        %1463 = vmatpush1.msra.mxu0 %v1434
        %1464 = vmatprep.subr.mxu0 0.0
        %1465 = vmatpush1.msra.mxu0 %v1433
        %1466 = vmatprep.subr.mxu0 0.0
        %1467 = vmatpush1.msra.mxu0 %v1432
        %1468 = vmatprep.subr.mxu0 0.0
        %1469 = vmatpush1.msra.mxu0 %v1431
        %1470 = vmatprep.subr.mxu0 0.0
        %1471 = vmatpush2.msra.mxu0 0.0
        %1472 = vmatprep.subr.mxu0 0.0
        %1473 = vmatpush2.msra.mxu0 0.0
        %1474 = vmatprep.subr.mxu0 0.0
        %1475 = vmatpush2.msra.mxu0 0.0
        %1476 = vmatprep.subr.mxu0 0.0
        %1477 = vmatpush2.msra.mxu0 0.0
        %1478 = vmatprep.subr.mxu0 0.0
        %1479 = vmatpush2.msra.mxu0 0.0
        %1480 = vmatprep.subr.mxu0 0.0
        %1481 = vmatpush2.msra.mxu0 0.0
        %1482 = vmatprep.subr.mxu0 0.0
        %1483 = vmatpush2.msra.mxu0 0.0
        %1484 = vmatprep.subr.mxu0 0.0
        %1485 = vmatpush2.msra.mxu0 0.0
        %1486 = vmatprep.subr.mxu0 0.0
        %1487 = vmatpush2.msra.mxu0 0.0
        %1488 = vmatprep.subr.mxu0 0.0
        %1489 = vmatpush2.msra.mxu0 0.0
        %1490 = vmatprep.subr.mxu0 0.0
        %1491 = vmatpush2.msra.mxu0 0.0
        %1492 = vmatprep.subr.mxu0 0.0
        %1493 = vmatpush2.msra.mxu0 0.0
        %1494 = vmatprep.subr.mxu0 0.0
        %1495 = vmatpush2.msra.mxu0 0.0
        %1496 = vmatprep.subr.mxu0 0.0
        %1497 = vmatpush2.msra.mxu0 0.0
        %1498 = vmatprep.subr.mxu0 0.0
        %1499 = vmatpush2.msra.mxu0 0.0
        %1500 = vmatprep.subr.mxu0 0.0
        %1501 = vmatpush2.msra.mxu0 0.0
        %1502 = vmatprep.mubr.f32.mxu0 0.0
        %1503 = vmatmul.mubr.f32.gmra.mxu0 %v1436
        %v1504 = vpop.f32.mrf.mxu0
        %v1505 = vadd.f32 0.0, %v1504
        %v1506 = vpop.f32.mrf.mxu0
        %1507 = vdwg.mxu0
        %v1508 = vmax.f32 %v1505, 0.0
        %v1509 = vld [vmem:[%s541] sm:$0xff]
        %v1510 = vld [vmem:[%s541 + $0x8] sm:$0xff]
        %v1511 = vld [vmem:[%s541 + $0x10] sm:$0xff]
        %v1512 = vld [vmem:[%s541 + $0x18] sm:$0xff]
        %v1513 = vld [vmem:[%s541 + $0x20] sm:$0xff]
        %v1514 = vld [vmem:[%s541 + $0x28] sm:$0xff]
        %v1515 = vld [vmem:[%s541 + $0x30] sm:$0xff]
        %v1516 = vld [vmem:[%s541 + $0x38] sm:$0xff]
        %vm1517 = vcmask 523264
        %v1519 = vsel %vm1517, %v1508, 0
        %1521 = vmatprep.subr.mxu0 0.0
        %1522 = vmatpush1.msra.mxu0 0.0
        %1523 = vmatprep.subr.mxu0 0.0
        %1524 = vmatpush1.msra.mxu0 0.0
        %1525 = vmatprep.subr.mxu0 0.0
        %1526 = vmatpush1.msra.mxu0 0.0
        %1527 = vmatprep.subr.mxu0 0.0
        %1528 = vmatpush1.msra.mxu0 0.0
        %1529 = vmatprep.subr.mxu0 0.0
        %1530 = vmatpush1.msra.mxu0 0.0
        %1531 = vmatprep.subr.mxu0 0.0
        %1532 = vmatpush1.msra.mxu0 0.0
        %1533 = vmatprep.subr.mxu0 0.0
        %1534 = vmatpush1.msra.mxu0 0.0
        %1535 = vmatprep.subr.mxu0 0.0
        %1536 = vmatpush1.msra.mxu0 0.0
        %1537 = vmatprep.subr.mxu0 0.0
        %1538 = vmatpush1.msra.mxu0 %v1516
        %1539 = vmatprep.subr.mxu0 0.0
        %1540 = vmatpush1.msra.mxu0 %v1515
        %1541 = vmatprep.subr.mxu0 0.0
        %1542 = vmatpush1.msra.mxu0 %v1514
        %1543 = vmatprep.subr.mxu0 0.0
        %1544 = vmatpush1.msra.mxu0 %v1513
        %1545 = vmatprep.subr.mxu0 0.0
        %1546 = vmatpush1.msra.mxu0 %v1512
        %1547 = vmatprep.subr.mxu0 0.0
        %1548 = vmatpush1.msra.mxu0 %v1511
        %1549 = vmatprep.subr.mxu0 0.0
        %1550 = vmatpush1.msra.mxu0 %v1510
        %1551 = vmatprep.subr.mxu0 0.0
        %1552 = vmatpush1.msra.mxu0 %v1509
        %1553 = vmatprep.subr.mxu0 0.0
        %1554 = vmatpush2.msra.mxu0 0.0
        %1555 = vmatprep.subr.mxu0 0.0
        %1556 = vmatpush2.msra.mxu0 0.0
        %1557 = vmatprep.subr.mxu0 0.0
        %1558 = vmatpush2.msra.mxu0 0.0
        %1559 = vmatprep.subr.mxu0 0.0
        %1560 = vmatpush2.msra.mxu0 0.0
        %1561 = vmatprep.subr.mxu0 0.0
        %1562 = vmatpush2.msra.mxu0 0.0
        %1563 = vmatprep.subr.mxu0 0.0
        %1564 = vmatpush2.msra.mxu0 0.0
        %1565 = vmatprep.subr.mxu0 0.0
        %1566 = vmatpush2.msra.mxu0 0.0
        %1567 = vmatprep.subr.mxu0 0.0
        %1568 = vmatpush2.msra.mxu0 0.0
        %1569 = vmatprep.subr.mxu0 0.0
        %1570 = vmatpush2.msra.mxu0 0.0
        %1571 = vmatprep.subr.mxu0 0.0
        %1572 = vmatpush2.msra.mxu0 0.0
        %1573 = vmatprep.subr.mxu0 0.0
        %1574 = vmatpush2.msra.mxu0 0.0
        %1575 = vmatprep.subr.mxu0 0.0
        %1576 = vmatpush2.msra.mxu0 0.0
        %1577 = vmatprep.subr.mxu0 0.0
        %1578 = vmatpush2.msra.mxu0 0.0
        %1579 = vmatprep.subr.mxu0 0.0
        %1580 = vmatpush2.msra.mxu0 0.0
        %1581 = vmatprep.subr.mxu0 0.0
        %1582 = vmatpush2.msra.mxu0 0.0
        %1583 = vmatprep.subr.mxu0 0.0
        %1584 = vmatpush2.msra.mxu0 0.0
        %1585 = vmatprep.mubr.f32.mxu0 0.0
        %1586 = vmatmul.mubr.f32.gmra.mxu0 %v1519
        %v1587 = vpop.f32.mrf.mxu0
        %v1588 = vadd.f32 0.0, %v1587
        %v1589 = vpop.f32.mrf.mxu0
        %1590 = vdwg.mxu0
        %v1591 = vadd.f32 %v1414, %v1588
        %1592 = vst.msk [vmem:[#allocation2] sm:$0xff] %vm556, %v1591
        %p1593 = scmp.eq.s32.totalorder %s31, 1
        // Predicated region
        $region73: #{t5_encoder_classifier_forward.1} parent=67 // pred_check
          %p1594 = pneg %p1593
        $region74: #{t5_encoder_classifier_forward.1} parent=67 // pred_check_branch
          %1596 = sbr.rel (%p1594) target = $region76
        $region75: #{t5_encoder_classifier_forward.1} parent=67 // pred_region
          %v1597 = vmul.f32 %v1591, %v1591
          %vm1598 = vcmask 253952
          %v1599 = vsel %vm1598, %v1597, 0.0
          %1600 = vadd.xlane.f32.xlu0 %v1599
          %v1601 = vpop.xlane.xlu0 %1600
          %v1602 = vmul.f32 %v1601, %v560
          %v1603 = vadd.f32 %v1602, 1e-06
          %v1604 = vrsqrt.pop %v1603
          %v1605 = vmul.f32 %v1591, %v1604
          %v1606 = vld [vmem:[%s9] sm:$0x1]
          %v1607 = vmul.f32 %v1605, %v1606
          %v1608 = vld [vmem:[%s10] sm:$0xff]
          %v1609 = vld [vmem:[%s10 + $0x8] sm:$0xff]
          %v1610 = vld [vmem:[%s10 + $0x10] sm:$0xff]
          %v1611 = vld [vmem:[%s10 + $0x18] sm:$0xff]
          %v1612 = vld [vmem:[%s11] sm:$0x1]
          %v1614 = vsel %vm556, %v1607, 0
          %1616 = vmatprep.subr.mxu0 0.0
          %1617 = vmatpush1.msra.mxu0 0.0
          %1618 = vmatprep.subr.mxu0 0.0
          %1619 = vmatpush1.msra.mxu0 0.0
          %1620 = vmatprep.subr.mxu0 0.0
          %1621 = vmatpush1.msra.mxu0 0.0
          %1622 = vmatprep.subr.mxu0 0.0
          %1623 = vmatpush1.msra.mxu0 0.0
          %1624 = vmatprep.subr.mxu0 0.0
          %1625 = vmatpush1.msra.mxu0 0.0
          %1626 = vmatprep.subr.mxu0 0.0
          %1627 = vmatpush1.msra.mxu0 0.0
          %1628 = vmatprep.subr.mxu0 0.0
          %1629 = vmatpush1.msra.mxu0 0.0
          %1630 = vmatprep.subr.mxu0 0.0
          %1631 = vmatpush1.msra.mxu0 0.0
          %1632 = vmatprep.subr.mxu0 0.0
          %1633 = vmatpush1.msra.mxu0 0.0
          %1634 = vmatprep.subr.mxu0 0.0
          %1635 = vmatpush1.msra.mxu0 0.0
          %1636 = vmatprep.subr.mxu0 0.0
          %1637 = vmatpush1.msra.mxu0 0.0
          %1638 = vmatprep.subr.mxu0 0.0
          %1639 = vmatpush1.msra.mxu0 0.0
          %1640 = vmatprep.subr.mxu0 0.0
          %1641 = vmatpush1.msra.mxu0 %v1611
          %1642 = vmatprep.subr.mxu0 0.0
          %1643 = vmatpush1.msra.mxu0 %v1610
          %1644 = vmatprep.subr.mxu0 0.0
          %1645 = vmatpush1.msra.mxu0 %v1609
          %1646 = vmatprep.subr.mxu0 0.0
          %1647 = vmatpush1.msra.mxu0 %v1608
          %1648 = vmatprep.subr.mxu0 0.0
          %1649 = vmatpush2.msra.mxu0 0.0
          %1650 = vmatprep.subr.mxu0 0.0
          %1651 = vmatpush2.msra.mxu0 0.0
          %1652 = vmatprep.subr.mxu0 0.0
          %1653 = vmatpush2.msra.mxu0 0.0
          %1654 = vmatprep.subr.mxu0 0.0
          %1655 = vmatpush2.msra.mxu0 0.0
          %1656 = vmatprep.subr.mxu0 0.0
          %1657 = vmatpush2.msra.mxu0 0.0
          %1658 = vmatprep.subr.mxu0 0.0
          %1659 = vmatpush2.msra.mxu0 0.0
          %1660 = vmatprep.subr.mxu0 0.0
          %1661 = vmatpush2.msra.mxu0 0.0
          %1662 = vmatprep.subr.mxu0 0.0
          %1663 = vmatpush2.msra.mxu0 0.0
          %1664 = vmatprep.subr.mxu0 0.0
          %1665 = vmatpush2.msra.mxu0 0.0
          %1666 = vmatprep.subr.mxu0 0.0
          %1667 = vmatpush2.msra.mxu0 0.0
          %1668 = vmatprep.subr.mxu0 0.0
          %1669 = vmatpush2.msra.mxu0 0.0
          %1670 = vmatprep.subr.mxu0 0.0
          %1671 = vmatpush2.msra.mxu0 0.0
          %1672 = vmatprep.subr.mxu0 0.0
          %1673 = vmatpush2.msra.mxu0 0.0
          %1674 = vmatprep.subr.mxu0 0.0
          %1675 = vmatpush2.msra.mxu0 0.0
          %1676 = vmatprep.subr.mxu0 0.0
          %1677 = vmatpush2.msra.mxu0 0.0
          %1678 = vmatprep.subr.mxu0 0.0
          %1679 = vmatpush2.msra.mxu0 0.0
          %1680 = vmatprep.mubr.f32.mxu0 0.0
          %1681 = vmatmul.mubr.f32.gmra.mxu0 %v1614
          %v1682 = vpop.f32.mrf.mxu0
          %v1683 = vadd.f32 %v1612, %v1682
          %v1684 = vpop.f32.mrf.mxu0
          %1685 = vdwg.mxu0
          %vm1686 = vcmask 8192
          %1687 = vst.msk [vmem:[%s508] sm:$0x1] %vm1686, %v1683
        $region76: #{t5_encoder_classifier_forward.1} parent=67 // pred_fallthru
          _
        %s1688 = sand.u32 %s338, 1
        %s1689 = scalar_lea.sflag [#allocation4], %s1688
        %s1690 = sand.u32 %s338, 1
        %s1691 = scalar_lea.vmem [#allocation3], %s1690
        // Predicated region
        $region77: #{t5_encoder_classifier_forward.1} parent=67 // pred_check
          %p1692 = pneg %p348
        $region78: #{t5_encoder_classifier_forward.1} parent=67 // pred_check_branch
          %1694 = sbr.rel (%p1692) target = $region80
        $region79: #{t5_encoder_classifier_forward.1} parent=67 // pred_region
          %s1696 = ssub.s32 16, 16
          %1697 = vsyncadd %s1689, %s1696
          %s1698 = smul.addr %s30, 16
          %s1699 = scalar_lea.hbm %s12, %s1698
          %s1701 = sshll.u32 %s1691, 4
          %s1702 = int_to_ptr.vmem [resolvable:$true] %s1701
          %1704 = dma.vmem_to_hbm [thread:$0]  %s1702, 16, %s1699, %s1689
        $region80: #{t5_encoder_classifier_forward.1} parent=67 // pred_fallthru
          _
      $region68: #{t5_encoder_classifier_forward.1} parent=5 // pred_fallthru
        _
      %p1705 = scmp.le.s32.totalorder 2, %s21
      // Predicated region
      $region81: #{t5_encoder_classifier_forward.1} parent=5 // pred_check
        %p1706 = pneg %p1705
      $region82: #{t5_encoder_classifier_forward.1} parent=5 // pred_check_branch
        %1708 = sbr.rel (%p1706) target = $region84
      $region83: #{t5_encoder_classifier_forward.1} parent=5 // pred_region
        %s1709 = ssub.s32 %s21, 2
        // Predicated region
        $region85: #{t5_encoder_classifier_forward.1} parent=83 // pred_check
          %p1710 = pneg %p354
        $region86: #{t5_encoder_classifier_forward.1} parent=83 // pred_check_branch
          %1712 = sbr.rel (%p1710) target = $region88
        $region87: #{t5_encoder_classifier_forward.1} parent=83 // pred_region
          %s1713 = sand.u32 %s339, 1
          %s1714 = scalar_lea.sflag [#allocation4], %s1713
          %s1715 = sand.u32 %s339, 1
          %s1716 = scalar_lea.vmem [#allocation3], %s1715
          %1717 = dma.done %s1714, 16
        $region88: #{t5_encoder_classifier_forward.1} parent=83 // pred_fallthru
          _
      $region84: #{t5_encoder_classifier_forward.1} parent=5 // pred_fallthru
        _
    $region6: #{t5_encoder_classifier_forward.1} parent=1 // loop_footer
      %s25 = sadd.s32 1, %s21
    $region7: #{t5_encoder_classifier_forward.1} parent=1 // loop_footer_branch
      %20 = sbr.rel target = $region3
    $region8: #{t5_encoder_classifier_forward.1} parent=1 // loop_exit
      _
    %1718 = vsyncpa [#allocation4], 1
    %s1719 = scalar_lea.sflag [#allocation4], 1
    %1720 = vsyncpa %s1719, 1

</llo_original>
